<compile_context>
chip_gen: v5e
topology: v5e:2x2
jax: 0.10.0
libtpu: 0.0.40
codegen_flags: <defaults>
</compile_context>

<pallas_src>
import numpy as np
import jax
import jax.numpy as jnp
from jax.experimental import pallas as pl
from jax.experimental.pallas import tpu as pltpu

F32 = jnp.float32


def _vmem():
    return pl.BlockSpec(memory_space=pltpu.MemorySpace.VMEM)


def _smem():
    return pl.BlockSpec(memory_space=pltpu.MemorySpace.SMEM)


# ------------------------------ model config --------------------------------

class Args:
    gnn_input = 16
    gnn_hid = 32
    gnn_output = 32          # must equal gnn_hid for the 'add' aggregate
    gnn_layers = 2
    gnn_dropout = 0.5
    trans_layers = 2
    trans_dropout = 0.5
    num_heads = 2
    alpha = 0.5
    use_bn = True
    use_residual = True
    use_weight = True
    use_act = False
    graph_weight = 0.8
    aggregate = 'add'
    transformer_width = 32
    embed_dim = 32           # must equal gnn_output for the logit matmul
    edge_coef = 1.0


# ------------------------------ fused kernel --------------------------------

def make_clip_kernel(a):
    H = a.num_heads
    M = a.gnn_hid            # per-head out_channels == hidden dim
    L = a.trans_layers
    G = a.gnn_layers

    def mm(x, y):            # x @ y
        return jax.lax.dot_general(x, y, (((1,), (0,)), ((), ())),
                                   preferred_element_type=jnp.float32)

    def mm_tn(x, y):         # x^T @ y   (contract axis 0; no materialized .T)
        return jax.lax.dot_general(x, y, (((0,), (0,)), ((), ())),
                                   preferred_element_type=jnp.float32)

    def mm_nt(x, y):         # x @ y^T   (contract axis 1)
        return jax.lax.dot_general(x, y, (((1,), (1,)), ((), ())),
                                   preferred_element_type=jnp.float32)

    def layernorm(h, g, b, relu):
        mean = jnp.mean(h, axis=-1, keepdims=True)
        var = jnp.mean((h - mean) ** 2, axis=-1, keepdims=True)
        y = (h - mean) * jax.lax.rsqrt(var + 1e-5) * g + b
        return jnp.maximum(y, 0.0) if relu else y

    def batchnorm(h, g, b, relu):
        # BatchNorm1d training mode: batch statistics, biased variance, eps=1e-5.
        mean = jnp.mean(h, axis=0, keepdims=True)
        var = jnp.mean((h - mean) ** 2, axis=0, keepdims=True)
        y = (h - mean) * jax.lax.rsqrt(var + 1e-5) * g + b
        return jnp.maximum(y, 0.0) if relu else y

    def kernel(*refs):
        it = iter(refs)
        x_ref = next(it); adj_ref = next(it); pool_ref = next(it)
        lbl_ref = next(it); ls_ref = next(it)
        fc0_w = next(it)[...]; fc0_b = next(it)[...]
        ln = [(next(it)[...], next(it)[...]) for _ in range(L + 1)]
        qkv_p = [(next(it)[...], next(it)[...]) for _ in range(L)]
        gcn_p = [(next(it)[...], next(it)[...]) for _ in range(G)]
        bn_p = [(next(it)[...], next(it)[...]) for _ in range(G - 1)]
        sg_w = next(it)[...]; sg_b = next(it)[...]
        text_proj = next(it)[...]
        loss_ref = next(it)

        x = x_ref[...]
        adj = adj_ref[...]
        n = x.shape[0]
        n_f = float(n)

        # ------------------------ TransConv branch --------------------------
        h = mm(x, fc0_w) + fc0_b
        if a.use_bn:
            h = layernorm(h, ln[0][0], ln[0][1], relu=True)
        else:
            h = jnp.maximum(h, 0.0)
        # TODO(synk): dropout is stochastic in the reference; identity (eval mode) here.
        layers = [h]
        for i in range(L):
            wqkv, bqkv = qkv_p[i]
            qkv_all = mm(h, wqkv) + bqkv                 # [N, 3*H*M] lane-dense
            q_all = qkv_all[:, 0:H * M]
            k_all = qkv_all[:, H * M:2 * H * M]
            v_all = qkv_all[:, 2 * H * M:3 * H * M]
            # Frobenius norms of the whole q / k tensors (reference semantics),
            # folded in as scalar rescales instead of full-tensor divides.
            q_scale = jax.lax.rsqrt(jnp.sum(q_all * q_all))
            k_scale = jax.lax.rsqrt(jnp.sum(k_all * k_all))
            qk_scale = q_scale * k_scale
            # one batched K^T V matmul; per-head blocks live on its diagonal
            ktv = mm_tn(k_all, v_all)                    # [H*M, H*M]
            acc = jnp.zeros((n, M), jnp.float32)
            for hh in range(H):                          # static unroll (H small)
                sl = slice(hh * M, (hh + 1) * M)
                qh = q_all[:, sl]
                kh = k_all[:, sl]
                vh = v_all[:, sl]
                kvs = ktv[sl, sl]
                num = mm(qh, kvs) * qk_scale + n_f * vh
                ks_sum = jnp.sum(kh, axis=0, keepdims=True)            # [1, M]
                denom = (jnp.sum(qh * ks_sum, axis=1, keepdims=True) * qk_scale
                         + n_f)                                        # [N, 1]
                acc = acc + num * pl.reciprocal(denom, approx=True)
            h_attn = acc * (1.0 / float(H))              # mean over heads
            if a.use_residual:
                h_attn = a.alpha * h_attn + (1.0 - a.alpha) * layers[i]
            if a.use_bn:
                h_attn = layernorm(h_attn, ln[i + 1][0], ln[i + 1][1],
                                   relu=a.use_act)
            elif a.use_act:
                h_attn = jnp.maximum(h_attn, 0.0)
            layers.append(h_attn)
            h = h_attn
        x1 = h

        # --------------------------- GCN branch -----------------------------
        hg = x
        for i in range(G - 1):
            hw = mm(hg, gcn_p[i][0])                     # x @ W
            hg = mm(adj, hw) + gcn_p[i][1]               # A_norm @ (xW) + b
            if a.use_bn:
                hg = batchnorm(hg, bn_p[i][0], bn_p[i][1], relu=True)
            else:
                hg = jnp.maximum(hg, 0.0)
        hw = mm(hg, gcn_p[G - 1][0])
        x2 = mm(adj, hw) + gcn_p[G - 1][1]

        # ------------------ aggregate + pool + head + loss -------------------
        if a.aggregate == 'add':
            xm = a.graph_weight * x2 + (1.0 - a.graph_weight) * x1
        else:
            xm = jnp.concatenate([x1, x2], axis=1)
        pooled = mm(pool_ref[...], xm)                   # global_mean_pool
        s_img = mm(pooled, sg_w) + sg_b
        s_text = mm(lbl_ref[...], text_proj)

        s_img = s_img * jax.lax.rsqrt(
            jnp.sum(s_img * s_img, axis=-1, keepdims=True))
        s_text = s_text * jax.lax.rsqrt(
            jnp.sum(s_text * s_text, axis=-1, keepdims=True))

        logits = jnp.exp(ls_ref[0, 0]) * mm_nt(s_img, s_text)     # [B, B]

        # 0.5 * (CE(logits, arange) + CE(logits.T, arange))
        b = logits.shape[0]
        ii = jax.lax.broadcasted_iota(jnp.int32, (b, b), 0)
        jj = jax.lax.broadcasted_iota(jnp.int32, (b, b), 1)
        diag = jnp.where(ii == jj, logits, 0.0)
        row_max = jnp.max(logits, axis=1, keepdims=True)
        lse_r = jnp.log(jnp.sum(jnp.exp(logits - row_max), axis=1,
                                keepdims=True)) + row_max
        col_max = jnp.max(logits, axis=0, keepdims=True)
        lse_c = jnp.log(jnp.sum(jnp.exp(logits - col_max), axis=0,
                                keepdims=True)) + col_max
        loss_i = jnp.mean(lse_r - jnp.sum(diag, axis=1, keepdims=True))
        loss_t = jnp.mean(lse_c - jnp.sum(diag, axis=0, keepdims=True))
        loss_ref[0, 0] = 0.5 * (loss_i + loss_t)

    return kernel


def clip_forward_loss(p, x, a_norm, pool_mat, pt_labels, a):
    L, G = a.trans_layers, a.gnn_layers
    args = [x.astype(F32), a_norm, pool_mat, pt_labels.astype(F32),
            p['logit_scale'].reshape(1, 1)]
    args += [p['tc_fc0_w'], p['tc_fc0_b']]
    for i in range(L + 1):
        args += [p['tc_ln_g'][i], p['tc_ln_b'][i]]
    for i in range(L):
        args += [p['tc_wqkv'][i], p['tc_bqkv'][i]]
    for i in range(G):
        args += [p['gcn_w'][i], p['gcn_b'][i]]
    for i in range(G - 1):
        args += [p['gcn_bn_g'][i], p['gcn_bn_b'][i]]
    args += [p['sg_fc_w'], p['sg_fc_b'], p['text_projection']]

    in_specs = [_vmem()] * len(args)
    in_specs[4] = _smem()        # logit_scale scalar lives in SMEM

    loss = pl.pallas_call(
        make_clip_kernel(a),
        out_shape=jax.ShapeDtypeStruct((1, 1), F32),
        in_specs=in_specs,
        out_specs=_smem(),
    )(*args)
    return loss[0, 0]


# ------------------------------- params / data -------------------------------

def init_params(key, a):
    keys = list(jax.random.split(key, 32))
    ki = iter(keys)

    def lin(k, fan_in, fan_out):
        w = jax.random.normal(k, (fan_in, fan_out), F32) / jnp.sqrt(float(fan_in))
        b = jnp.zeros((1, fan_out), F32)
        return w, b

    p = {}
    # TransConv
    p['tc_fc0_w'], p['tc_fc0_b'] = lin(next(ki), a.gnn_input, a.gnn_hid)
    p['tc_ln_g'] = [jnp.ones((1, a.gnn_hid), F32) for _ in range(a.trans_layers + 1)]
    p['tc_ln_b'] = [jnp.zeros((1, a.gnn_hid), F32) for _ in range(a.trans_layers + 1)]
    p['tc_wqkv'], p['tc_bqkv'] = [], []
    hm = a.gnn_hid * a.num_heads
    for _ in range(a.trans_layers):
        wq, bq = lin(next(ki), a.gnn_hid, hm)
        wk, bk = lin(next(ki), a.gnn_hid, hm)
        wv, bv = lin(next(ki), a.gnn_hid, hm)
        # packed lane-dense QKV projection: [hid, 3*H*M]
        p['tc_wqkv'].append(jnp.concatenate([wq, wk, wv], axis=1))
        p['tc_bqkv'].append(jnp.concatenate([bq, bk, bv], axis=1))
    # GCN
    dims = [a.gnn_input] + [a.gnn_hid] * (a.gnn_layers - 1) + [a.gnn_output]
    p['gcn_w'], p['gcn_b'] = [], []
    for i in range(a.gnn_layers):
        w, b = lin(next(ki), dims[i], dims[i + 1])
        p['gcn_w'].append(w)
        p['gcn_b'].append(b)
    p['gcn_bn_g'] = [jnp.ones((1, a.gnn_hid), F32) for _ in range(a.gnn_layers - 1)]
    p['gcn_bn_b'] = [jnp.zeros((1, a.gnn_hid), F32) for _ in range(a.gnn_layers - 1)]
    # SGFormer output head
    p['sg_fc_w'], p['sg_fc_b'] = lin(next(ki), a.gnn_hid, a.gnn_output)
    # CLIP
    p['text_projection'] = (jax.random.normal(next(ki),
                                              (a.transformer_width, a.embed_dim), F32)
                            * (a.transformer_width ** -0.5))
    p['logit_scale'] = jnp.asarray(np.log(1.0 / 0.07), F32)
    return p


def build_gcn_norm_adj(edge_index, num_nodes):
    # Dense D^{-1/2} (A + I) D^{-1/2}  (GCNConv symmetric normalization).
    # Duplicate edges sum (matches PyG message aggregation).
    src, dst = edge_index[0], edge_index[1]
    adj = jnp.zeros((num_nodes, num_nodes), F32).at[dst, src].add(1.0)
    adj = adj + jnp.eye(num_nodes, dtype=F32)
    deg = jnp.sum(adj, axis=1)
    d_inv_sqrt = jnp.where(deg > 0, 1.0 / jnp.sqrt(deg), 0.0)
    return adj * d_inv_sqrt[:, None] * d_inv_sqrt[None, :]


def build_mean_pool_matrix(batch, num_graphs):
    oh = (batch[None, :] == jnp.arange(num_graphs, dtype=batch.dtype)[:, None]).astype(F32)
    counts = jnp.maximum(jnp.sum(oh, axis=1, keepdims=True), 1.0)
    return oh / counts


if __name__ == "__main__":
    a = Args()
    key = jax.random.PRNGKey(0)
    k_x, k_lbl, k_par = jax.random.split(key, 3)

    n_nodes, n_graphs = 24, 4
    x = jax.random.normal(k_x, (n_nodes, a.gnn_input), F32)
    # symmetric ring graph
    src = np.arange(n_nodes)
    dst = (np.arange(n_nodes) + 1) % n_nodes
    edge_index = jnp.asarray(np.stack([np.concatenate([src, dst]),
                                       np.concatenate([dst, src])]), dtype=jnp.int32)
    batch = jnp.repeat(jnp.arange(n_graphs, dtype=jnp.int32), n_nodes // n_graphs)
    # TODO(synk): reference loads 'embed_lb.npy'; replaced with deterministic synthetic label embeddings.
    pt_labels = jax.random.normal(k_lbl, (n_graphs, a.transformer_width), F32)

    params = init_params(k_par, a)
    a_norm = build_gcn_norm_adj(edge_index, n_nodes)
    pool_mat = build_mean_pool_matrix(batch, n_graphs)

    # TODO(synk): optimizer step / backward of CLIP.forward are training-side effects; only the loss is computed.
    loss = clip_forward_loss(params, x, a_norm, pool_mat, pt_labels, a)
    loss = jax.block_until_ready(loss)
    assert np.isfinite(float(loss)), f"non-finite loss: {loss}"
    print("KERNEL_OK")
</pallas_src>

<mosaic_0001>
module attributes {stable_mosaic.version = 11 : i64} {
  func.func @kernel(%arg0: memref<24x16xf32, #tpu.memory_space<vmem>>, %arg1: memref<24x24xf32, #tpu.memory_space<vmem>>, %arg2: memref<4x24xf32, #tpu.memory_space<vmem>>, %arg3: memref<4x32xf32, #tpu.memory_space<vmem>>, %arg4: memref<1x1xf32, #tpu.memory_space<smem>>, %arg5: memref<16x32xf32, #tpu.memory_space<vmem>>, %arg6: memref<1x32xf32, #tpu.memory_space<vmem>>, %arg7: memref<1x32xf32, #tpu.memory_space<vmem>>, %arg8: memref<1x32xf32, #tpu.memory_space<vmem>>, %arg9: memref<1x32xf32, #tpu.memory_space<vmem>>, %arg10: memref<1x32xf32, #tpu.memory_space<vmem>>, %arg11: memref<1x32xf32, #tpu.memory_space<vmem>>, %arg12: memref<1x32xf32, #tpu.memory_space<vmem>>, %arg13: memref<32x192xf32, #tpu.memory_space<vmem>>, %arg14: memref<1x192xf32, #tpu.memory_space<vmem>>, %arg15: memref<32x192xf32, #tpu.memory_space<vmem>>, %arg16: memref<1x192xf32, #tpu.memory_space<vmem>>, %arg17: memref<16x32xf32, #tpu.memory_space<vmem>>, %arg18: memref<1x32xf32, #tpu.memory_space<vmem>>, %arg19: memref<32x32xf32, #tpu.memory_space<vmem>>, %arg20: memref<1x32xf32, #tpu.memory_space<vmem>>, %arg21: memref<1x32xf32, #tpu.memory_space<vmem>>, %arg22: memref<1x32xf32, #tpu.memory_space<vmem>>, %arg23: memref<32x32xf32, #tpu.memory_space<vmem>>, %arg24: memref<1x32xf32, #tpu.memory_space<vmem>>, %arg25: memref<32x32xf32, #tpu.memory_space<vmem>>, %arg26: memref<1x1xf32, #tpu.memory_space<smem>>) attributes {dimension_semantics = [], scalar_prefetch = 0 : i64, scratch_operands = 0 : i64, tpu.core_type = #tpu.core_type<tc>} {
    %c0 = arith.constant 0 : index
    %c0_0 = arith.constant 0 : index
    %0 = vector.load %arg5[%c0, %c0_0] : memref<16x32xf32, #tpu.memory_space<vmem>>, vector<16x32xf32>
    %c0_1 = arith.constant 0 : index
    %c0_2 = arith.constant 0 : index
    %1 = vector.load %arg6[%c0_1, %c0_2] : memref<1x32xf32, #tpu.memory_space<vmem>>, vector<1x32xf32>
    %c0_3 = arith.constant 0 : index
    %c0_4 = arith.constant 0 : index
    %2 = vector.load %arg7[%c0_3, %c0_4] : memref<1x32xf32, #tpu.memory_space<vmem>>, vector<1x32xf32>
    %c0_5 = arith.constant 0 : index
    %c0_6 = arith.constant 0 : index
    %3 = vector.load %arg8[%c0_5, %c0_6] : memref<1x32xf32, #tpu.memory_space<vmem>>, vector<1x32xf32>
    %c0_7 = arith.constant 0 : index
    %c0_8 = arith.constant 0 : index
    %4 = vector.load %arg9[%c0_7, %c0_8] : memref<1x32xf32, #tpu.memory_space<vmem>>, vector<1x32xf32>
    %c0_9 = arith.constant 0 : index
    %c0_10 = arith.constant 0 : index
    %5 = vector.load %arg10[%c0_9, %c0_10] : memref<1x32xf32, #tpu.memory_space<vmem>>, vector<1x32xf32>
    %c0_11 = arith.constant 0 : index
    %c0_12 = arith.constant 0 : index
    %6 = vector.load %arg11[%c0_11, %c0_12] : memref<1x32xf32, #tpu.memory_space<vmem>>, vector<1x32xf32>
    %c0_13 = arith.constant 0 : index
    %c0_14 = arith.constant 0 : index
    %7 = vector.load %arg12[%c0_13, %c0_14] : memref<1x32xf32, #tpu.memory_space<vmem>>, vector<1x32xf32>
    %c0_15 = arith.constant 0 : index
    %c0_16 = arith.constant 0 : index
    %8 = vector.load %arg13[%c0_15, %c0_16] : memref<32x192xf32, #tpu.memory_space<vmem>>, vector<32x192xf32>
    %c0_17 = arith.constant 0 : index
    %c0_18 = arith.constant 0 : index
    %9 = vector.load %arg14[%c0_17, %c0_18] : memref<1x192xf32, #tpu.memory_space<vmem>>, vector<1x192xf32>
    %c0_19 = arith.constant 0 : index
    %c0_20 = arith.constant 0 : index
    %10 = vector.load %arg15[%c0_19, %c0_20] : memref<32x192xf32, #tpu.memory_space<vmem>>, vector<32x192xf32>
    %c0_21 = arith.constant 0 : index
    %c0_22 = arith.constant 0 : index
    %11 = vector.load %arg16[%c0_21, %c0_22] : memref<1x192xf32, #tpu.memory_space<vmem>>, vector<1x192xf32>
    %c0_23 = arith.constant 0 : index
    %c0_24 = arith.constant 0 : index
    %12 = vector.load %arg17[%c0_23, %c0_24] : memref<16x32xf32, #tpu.memory_space<vmem>>, vector<16x32xf32>
    %c0_25 = arith.constant 0 : index
    %c0_26 = arith.constant 0 : index
    %13 = vector.load %arg18[%c0_25, %c0_26] : memref<1x32xf32, #tpu.memory_space<vmem>>, vector<1x32xf32>
    %c0_27 = arith.constant 0 : index
    %c0_28 = arith.constant 0 : index
    %14 = vector.load %arg19[%c0_27, %c0_28] : memref<32x32xf32, #tpu.memory_space<vmem>>, vector<32x32xf32>
    %c0_29 = arith.constant 0 : index
    %c0_30 = arith.constant 0 : index
    %15 = vector.load %arg20[%c0_29, %c0_30] : memref<1x32xf32, #tpu.memory_space<vmem>>, vector<1x32xf32>
    %c0_31 = arith.constant 0 : index
    %c0_32 = arith.constant 0 : index
    %16 = vector.load %arg21[%c0_31, %c0_32] : memref<1x32xf32, #tpu.memory_space<vmem>>, vector<1x32xf32>
    %c0_33 = arith.constant 0 : index
    %c0_34 = arith.constant 0 : index
    %17 = vector.load %arg22[%c0_33, %c0_34] : memref<1x32xf32, #tpu.memory_space<vmem>>, vector<1x32xf32>
    %c0_35 = arith.constant 0 : index
    %c0_36 = arith.constant 0 : index
    %18 = vector.load %arg23[%c0_35, %c0_36] : memref<32x32xf32, #tpu.memory_space<vmem>>, vector<32x32xf32>
    %c0_37 = arith.constant 0 : index
    %c0_38 = arith.constant 0 : index
    %19 = vector.load %arg24[%c0_37, %c0_38] : memref<1x32xf32, #tpu.memory_space<vmem>>, vector<1x32xf32>
    %c0_39 = arith.constant 0 : index
    %c0_40 = arith.constant 0 : index
    %20 = vector.load %arg25[%c0_39, %c0_40] : memref<32x32xf32, #tpu.memory_space<vmem>>, vector<32x32xf32>
    %c0_41 = arith.constant 0 : index
    %c0_42 = arith.constant 0 : index
    %21 = vector.load %arg0[%c0_41, %c0_42] : memref<24x16xf32, #tpu.memory_space<vmem>>, vector<24x16xf32>
    %c0_43 = arith.constant 0 : index
    %c0_44 = arith.constant 0 : index
    %22 = vector.load %arg1[%c0_43, %c0_44] : memref<24x24xf32, #tpu.memory_space<vmem>>, vector<24x24xf32>
    %cst = arith.constant dense<0.000000e+00> : vector<24x32xf32>
    %23 = tpu.matmul %21, %0, %cst {dimension_numbers = #tpu.dot_dimension_numbers<[1], [0], [0], [1], [0, 0, 1, 1], [], []>} : vector<24x16xf32>, vector<16x32xf32>, vector<24x32xf32> -> vector<24x32xf32>
    %24 = vector.broadcast %1 : vector<1x32xf32> to vector<24x32xf32>
    %25 = arith.addf %23, %24 : vector<24x32xf32>
    %cst_45 = arith.constant dense<0.000000e+00> : vector<24xf32>
    %26 = vector.multi_reduction <add>, %25, %cst_45 [1] : vector<24x32xf32> to vector<24xf32>
    %27 = vector.shape_cast %26 : vector<24xf32> to vector<24x1xf32>
    %cst_46 = arith.constant 3.200000e+01 : f32
    %28 = vector.broadcast %cst_46 : f32 to vector<24x1xf32>
    %29 = arith.divf %27, %28 : vector<24x1xf32>
    %30 = vector.broadcast %29 : vector<24x1xf32> to vector<24x32xf32>
    %31 = arith.subf %25, %30 : vector<24x32xf32>
    %32 = arith.mulf %31, %31 : vector<24x32xf32>
    %cst_47 = arith.constant dense<0.000000e+00> : vector<24xf32>
    %33 = vector.multi_reduction <add>, %32, %cst_47 [1] : vector<24x32xf32> to vector<24xf32>
    %34 = vector.shape_cast %33 : vector<24xf32> to vector<24x1xf32>
    %cst_48 = arith.constant 3.200000e+01 : f32
    %35 = vector.broadcast %cst_48 : f32 to vector<24x1xf32>
    %36 = arith.divf %34, %35 : vector<24x1xf32>
    %37 = vector.broadcast %29 : vector<24x1xf32> to vector<24x32xf32>
    %38 = arith.subf %25, %37 : vector<24x32xf32>
    %cst_49 = arith.constant 9.99999974E-6 : f32
    %39 = vector.broadcast %cst_49 : f32 to vector<24x1xf32>
    %40 = arith.addf %36, %39 : vector<24x1xf32>
    %41 = math.rsqrt %40 : vector<24x1xf32>
    %42 = vector.broadcast %41 : vector<24x1xf32> to vector<24x32xf32>
    %43 = arith.mulf %38, %42 : vector<24x32xf32>
    %44 = vector.broadcast %2 : vector<1x32xf32> to vector<24x32xf32>
    %45 = arith.mulf %43, %44 : vector<24x32xf32>
    %46 = vector.broadcast %3 : vector<1x32xf32> to vector<24x32xf32>
    %47 = arith.addf %45, %46 : vector<24x32xf32>
    %cst_50 = arith.constant 0.000000e+00 : f32
    %48 = vector.broadcast %cst_50 : f32 to vector<24x32xf32>
    %49 = arith.maximumf %47, %48 : vector<24x32xf32>
    %cst_51 = arith.constant dense<0.000000e+00> : vector<24x192xf32>
    %50 = tpu.matmul %49, %8, %cst_51 {dimension_numbers = #tpu.dot_dimension_numbers<[1], [0], [0], [1], [0, 0, 1, 1], [], []>} : vector<24x32xf32>, vector<32x192xf32>, vector<24x192xf32> -> vector<24x192xf32>
    %51 = vector.broadcast %9 : vector<1x192xf32> to vector<24x192xf32>
    %52 = arith.addf %50, %51 : vector<24x192xf32>
    %53 = vector.extract_strided_slice %52 {offsets = [0, 0], sizes = [24, 64], strides = [1, 1]} : vector<24x192xf32> to vector<24x64xf32>
    %54 = vector.extract_strided_slice %52 {offsets = [0, 64], sizes = [24, 64], strides = [1, 1]} : vector<24x192xf32> to vector<24x64xf32>
    %55 = vector.extract_strided_slice %52 {offsets = [0, 128], sizes = [24, 64], strides = [1, 1]} : vector<24x192xf32> to vector<24x64xf32>
    %56 = arith.mulf %53, %53 : vector<24x64xf32>
    %57 = vector.shape_cast %56 : vector<24x64xf32> to vector<1x24x64xf32>
    %cst_52 = arith.constant dense<0.000000e+00> : vector<1xf32>
    %58 = vector.multi_reduction <add>, %57, %cst_52 [1, 2] : vector<1x24x64xf32> to vector<1xf32>
    %59 = vector.shape_cast %58 : vector<1xf32> to vector<1x1x1xf32>
    %60 = vector.extract %59[0, 0, 0] : f32 from vector<1x1x1xf32>
    %61 = math.rsqrt %60 : f32
    %62 = arith.mulf %54, %54 : vector<24x64xf32>
    %63 = vector.shape_cast %62 : vector<24x64xf32> to vector<1x24x64xf32>
    %cst_53 = arith.constant dense<0.000000e+00> : vector<1xf32>
    %64 = vector.multi_reduction <add>, %63, %cst_53 [1, 2] : vector<1x24x64xf32> to vector<1xf32>
    %65 = vector.shape_cast %64 : vector<1xf32> to vector<1x1x1xf32>
    %66 = vector.extract %65[0, 0, 0] : f32 from vector<1x1x1xf32>
    %67 = math.rsqrt %66 : f32
    %68 = arith.mulf %61, %67 : f32
    %cst_54 = arith.constant dense<0.000000e+00> : vector<64x64xf32>
    %69 = tpu.matmul %54, %55, %cst_54 {dimension_numbers = #tpu.dot_dimension_numbers<[0], [0], [1], [1], [0, 1, 1, 1], [], []>} : vector<24x64xf32>, vector<24x64xf32>, vector<64x64xf32> -> vector<64x64xf32>
    %cst_55 = arith.constant 0.000000e+00 : f32
    %70 = vector.broadcast %cst_55 : f32 to vector<24x32xf32>
    %71 = vector.extract_strided_slice %53 {offsets = [0, 0], sizes = [24, 32], strides = [1, 1]} : vector<24x64xf32> to vector<24x32xf32>
    %72 = vector.extract_strided_slice %54 {offsets = [0, 0], sizes = [24, 32], strides = [1, 1]} : vector<24x64xf32> to vector<24x32xf32>
    %73 = vector.extract_strided_slice %55 {offsets = [0, 0], sizes = [24, 32], strides = [1, 1]} : vector<24x64xf32> to vector<24x32xf32>
    %74 = vector.extract_strided_slice %69 {offsets = [0, 0], sizes = [32, 32], strides = [1, 1]} : vector<64x64xf32> to vector<32x32xf32>
    %cst_56 = arith.constant dense<0.000000e+00> : vector<24x32xf32>
    %75 = tpu.matmul %71, %74, %cst_56 {dimension_numbers = #tpu.dot_dimension_numbers<[1], [0], [0], [1], [0, 0, 1, 1], [], []>} : vector<24x32xf32>, vector<32x32xf32>, vector<24x32xf32> -> vector<24x32xf32>
    %76 = vector.broadcast %68 : f32 to vector<24x32xf32>
    %77 = arith.mulf %75, %76 : vector<24x32xf32>
    %cst_57 = arith.constant 2.400000e+01 : f32
    %78 = vector.broadcast %cst_57 : f32 to vector<24x32xf32>
    %79 = arith.mulf %78, %73 : vector<24x32xf32>
    %80 = arith.addf %77, %79 : vector<24x32xf32>
    %cst_58 = arith.constant dense<0.000000e+00> : vector<32xf32>
    %81 = vector.multi_reduction <add>, %72, %cst_58 [0] : vector<24x32xf32> to vector<32xf32>
    %82 = vector.shape_cast %81 : vector<32xf32> to vector<1x32xf32>
    %83 = vector.broadcast %82 : vector<1x32xf32> to vector<24x32xf32>
    %84 = arith.mulf %71, %83 : vector<24x32xf32>
    %cst_59 = arith.constant dense<0.000000e+00> : vector<24xf32>
    %85 = vector.multi_reduction <add>, %84, %cst_59 [1] : vector<24x32xf32> to vector<24xf32>
    %86 = vector.shape_cast %85 : vector<24xf32> to vector<24x1xf32>
    %87 = vector.broadcast %68 : f32 to vector<24x1xf32>
    %88 = arith.mulf %86, %87 : vector<24x1xf32>
    %cst_60 = arith.constant 2.400000e+01 : f32
    %89 = vector.broadcast %cst_60 : f32 to vector<24x1xf32>
    %90 = arith.addf %88, %89 : vector<24x1xf32>
    %91 = tpu.reciprocal %90 {approx = true} : vector<24x1xf32> -> vector<24x1xf32>
    %92 = vector.broadcast %91 : vector<24x1xf32> to vector<24x32xf32>
    %93 = arith.mulf %80, %92 : vector<24x32xf32>
    %94 = arith.addf %70, %93 : vector<24x32xf32>
    %95 = vector.extract_strided_slice %53 {offsets = [0, 32], sizes = [24, 32], strides = [1, 1]} : vector<24x64xf32> to vector<24x32xf32>
    %96 = vector.extract_strided_slice %54 {offsets = [0, 32], sizes = [24, 32], strides = [1, 1]} : vector<24x64xf32> to vector<24x32xf32>
    %97 = vector.extract_strided_slice %55 {offsets = [0, 32], sizes = [24, 32], strides = [1, 1]} : vector<24x64xf32> to vector<24x32xf32>
    %98 = vector.extract_strided_slice %69 {offsets = [32, 32], sizes = [32, 32], strides = [1, 1]} : vector<64x64xf32> to vector<32x32xf32>
    %cst_61 = arith.constant dense<0.000000e+00> : vector<24x32xf32>
    %99 = tpu.matmul %95, %98, %cst_61 {dimension_numbers = #tpu.dot_dimension_numbers<[1], [0], [0], [1], [0, 0, 1, 1], [], []>} : vector<24x32xf32>, vector<32x32xf32>, vector<24x32xf32> -> vector<24x32xf32>
    %100 = vector.broadcast %68 : f32 to vector<24x32xf32>
    %101 = arith.mulf %99, %100 : vector<24x32xf32>
    %cst_62 = arith.constant 2.400000e+01 : f32
    %102 = vector.broadcast %cst_62 : f32 to vector<24x32xf32>
    %103 = arith.mulf %102, %97 : vector<24x32xf32>
    %104 = arith.addf %101, %103 : vector<24x32xf32>
    %cst_63 = arith.constant dense<0.000000e+00> : vector<32xf32>
    %105 = vector.multi_reduction <add>, %96, %cst_63 [0] : vector<24x32xf32> to vector<32xf32>
    %106 = vector.shape_cast %105 : vector<32xf32> to vector<1x32xf32>
    %107 = vector.broadcast %106 : vector<1x32xf32> to vector<24x32xf32>
    %108 = arith.mulf %95, %107 : vector<24x32xf32>
    %cst_64 = arith.constant dense<0.000000e+00> : vector<24xf32>
    %109 = vector.multi_reduction <add>, %108, %cst_64 [1] : vector<24x32xf32> to vector<24xf32>
    %110 = vector.shape_cast %109 : vector<24xf32> to vector<24x1xf32>
    %111 = vector.broadcast %68 : f32 to vector<24x1xf32>
    %112 = arith.mulf %110, %111 : vector<24x1xf32>
    %cst_65 = arith.constant 2.400000e+01 : f32
    %113 = vector.broadcast %cst_65 : f32 to vector<24x1xf32>
    %114 = arith.addf %112, %113 : vector<24x1xf32>
    %115 = tpu.reciprocal %114 {approx = true} : vector<24x1xf32> -> vector<24x1xf32>
    %116 = vector.broadcast %115 : vector<24x1xf32> to vector<24x32xf32>
    %117 = arith.mulf %104, %116 : vector<24x32xf32>
    %118 = arith.addf %94, %117 : vector<24x32xf32>
    %cst_66 = arith.constant 5.000000e-01 : f32
    %119 = vector.broadcast %cst_66 : f32 to vector<24x32xf32>
    %120 = arith.mulf %118, %119 : vector<24x32xf32>
    %cst_67 = arith.constant 5.000000e-01 : f32
    %121 = vector.broadcast %cst_67 : f32 to vector<24x32xf32>
    %122 = arith.mulf %121, %120 : vector<24x32xf32>
    %cst_68 = arith.constant 5.000000e-01 : f32
    %123 = vector.broadcast %cst_68 : f32 to vector<24x32xf32>
    %124 = arith.mulf %123, %49 : vector<24x32xf32>
    %125 = arith.addf %122, %124 : vector<24x32xf32>
    %cst_69 = arith.constant dense<0.000000e+00> : vector<24xf32>
    %126 = vector.multi_reduction <add>, %125, %cst_69 [1] : vector<24x32xf32> to vector<24xf32>
    %127 = vector.shape_cast %126 : vector<24xf32> to vector<24x1xf32>
    %cst_70 = arith.constant 3.200000e+01 : f32
    %128 = vector.broadcast %cst_70 : f32 to vector<24x1xf32>
    %129 = arith.divf %127, %128 : vector<24x1xf32>
    %130 = vector.broadcast %129 : vector<24x1xf32> to vector<24x32xf32>
    %131 = arith.subf %125, %130 : vector<24x32xf32>
    %132 = arith.mulf %131, %131 : vector<24x32xf32>
    %cst_71 = arith.constant dense<0.000000e+00> : vector<24xf32>
    %133 = vector.multi_reduction <add>, %132, %cst_71 [1] : vector<24x32xf32> to vector<24xf32>
    %134 = vector.shape_cast %133 : vector<24xf32> to vector<24x1xf32>
    %cst_72 = arith.constant 3.200000e+01 : f32
    %135 = vector.broadcast %cst_72 : f32 to vector<24x1xf32>
    %136 = arith.divf %134, %135 : vector<24x1xf32>
    %137 = vector.broadcast %129 : vector<24x1xf32> to vector<24x32xf32>
    %138 = arith.subf %125, %137 : vector<24x32xf32>
    %cst_73 = arith.constant 9.99999974E-6 : f32
    %139 = vector.broadcast %cst_73 : f32 to vector<24x1xf32>
    %140 = arith.addf %136, %139 : vector<24x1xf32>
    %141 = math.rsqrt %140 : vector<24x1xf32>
    %142 = vector.broadcast %141 : vector<24x1xf32> to vector<24x32xf32>
    %143 = arith.mulf %138, %142 : vector<24x32xf32>
    %144 = vector.broadcast %4 : vector<1x32xf32> to vector<24x32xf32>
    %145 = arith.mulf %143, %144 : vector<24x32xf32>
    %146 = vector.broadcast %5 : vector<1x32xf32> to vector<24x32xf32>
    %147 = arith.addf %145, %146 : vector<24x32xf32>
    %cst_74 = arith.constant dense<0.000000e+00> : vector<24x192xf32>
    %148 = tpu.matmul %147, %10, %cst_74 {dimension_numbers = #tpu.dot_dimension_numbers<[1], [0], [0], [1], [0, 0, 1, 1], [], []>} : vector<24x32xf32>, vector<32x192xf32>, vector<24x192xf32> -> vector<24x192xf32>
    %149 = vector.broadcast %11 : vector<1x192xf32> to vector<24x192xf32>
    %150 = arith.addf %148, %149 : vector<24x192xf32>
    %151 = vector.extract_strided_slice %150 {offsets = [0, 0], sizes = [24, 64], strides = [1, 1]} : vector<24x192xf32> to vector<24x64xf32>
    %152 = vector.extract_strided_slice %150 {offsets = [0, 64], sizes = [24, 64], strides = [1, 1]} : vector<24x192xf32> to vector<24x64xf32>
    %153 = vector.extract_strided_slice %150 {offsets = [0, 128], sizes = [24, 64], strides = [1, 1]} : vector<24x192xf32> to vector<24x64xf32>
    %154 = arith.mulf %151, %151 : vector<24x64xf32>
    %155 = vector.shape_cast %154 : vector<24x64xf32> to vector<1x24x64xf32>
    %cst_75 = arith.constant dense<0.000000e+00> : vector<1xf32>
    %156 = vector.multi_reduction <add>, %155, %cst_75 [1, 2] : vector<1x24x64xf32> to vector<1xf32>
    %157 = vector.shape_cast %156 : vector<1xf32> to vector<1x1x1xf32>
    %158 = vector.extract %157[0, 0, 0] : f32 from vector<1x1x1xf32>
    %159 = math.rsqrt %158 : f32
    %160 = arith.mulf %152, %152 : vector<24x64xf32>
    %161 = vector.shape_cast %160 : vector<24x64xf32> to vector<1x24x64xf32>
    %cst_76 = arith.constant dense<0.000000e+00> : vector<1xf32>
    %162 = vector.multi_reduction <add>, %161, %cst_76 [1, 2] : vector<1x24x64xf32> to vector<1xf32>
    %163 = vector.shape_cast %162 : vector<1xf32> to vector<1x1x1xf32>
    %164 = vector.extract %163[0, 0, 0] : f32 from vector<1x1x1xf32>
    %165 = math.rsqrt %164 : f32
    %166 = arith.mulf %159, %165 : f32
    %cst_77 = arith.constant dense<0.000000e+00> : vector<64x64xf32>
    %167 = tpu.matmul %152, %153, %cst_77 {dimension_numbers = #tpu.dot_dimension_numbers<[0], [0], [1], [1], [0, 1, 1, 1], [], []>} : vector<24x64xf32>, vector<24x64xf32>, vector<64x64xf32> -> vector<64x64xf32>
    %cst_78 = arith.constant 0.000000e+00 : f32
    %168 = vector.broadcast %cst_78 : f32 to vector<24x32xf32>
    %169 = vector.extract_strided_slice %151 {offsets = [0, 0], sizes = [24, 32], strides = [1, 1]} : vector<24x64xf32> to vector<24x32xf32>
    %170 = vector.extract_strided_slice %152 {offsets = [0, 0], sizes = [24, 32], strides = [1, 1]} : vector<24x64xf32> to vector<24x32xf32>
    %171 = vector.extract_strided_slice %153 {offsets = [0, 0], sizes = [24, 32], strides = [1, 1]} : vector<24x64xf32> to vector<24x32xf32>
    %172 = vector.extract_strided_slice %167 {offsets = [0, 0], sizes = [32, 32], strides = [1, 1]} : vector<64x64xf32> to vector<32x32xf32>
    %cst_79 = arith.constant dense<0.000000e+00> : vector<24x32xf32>
    %173 = tpu.matmul %169, %172, %cst_79 {dimension_numbers = #tpu.dot_dimension_numbers<[1], [0], [0], [1], [0, 0, 1, 1], [], []>} : vector<24x32xf32>, vector<32x32xf32>, vector<24x32xf32> -> vector<24x32xf32>
    %174 = vector.broadcast %166 : f32 to vector<24x32xf32>
    %175 = arith.mulf %173, %174 : vector<24x32xf32>
    %cst_80 = arith.constant 2.400000e+01 : f32
    %176 = vector.broadcast %cst_80 : f32 to vector<24x32xf32>
    %177 = arith.mulf %176, %171 : vector<24x32xf32>
    %178 = arith.addf %175, %177 : vector<24x32xf32>
    %cst_81 = arith.constant dense<0.000000e+00> : vector<32xf32>
    %179 = vector.multi_reduction <add>, %170, %cst_81 [0] : vector<24x32xf32> to vector<32xf32>
    %180 = vector.shape_cast %179 : vector<32xf32> to vector<1x32xf32>
    %181 = vector.broadcast %180 : vector<1x32xf32> to vector<24x32xf32>
    %182 = arith.mulf %169, %181 : vector<24x32xf32>
    %cst_82 = arith.constant dense<0.000000e+00> : vector<24xf32>
    %183 = vector.multi_reduction <add>, %182, %cst_82 [1] : vector<24x32xf32> to vector<24xf32>
    %184 = vector.shape_cast %183 : vector<24xf32> to vector<24x1xf32>
    %185 = vector.broadcast %166 : f32 to vector<24x1xf32>
    %186 = arith.mulf %184, %185 : vector<24x1xf32>
    %cst_83 = arith.constant 2.400000e+01 : f32
    %187 = vector.broadcast %cst_83 : f32 to vector<24x1xf32>
    %188 = arith.addf %186, %187 : vector<24x1xf32>
    %189 = tpu.reciprocal %188 {approx = true} : vector<24x1xf32> -> vector<24x1xf32>
    %190 = vector.broadcast %189 : vector<24x1xf32> to vector<24x32xf32>
    %191 = arith.mulf %178, %190 : vector<24x32xf32>
    %192 = arith.addf %168, %191 : vector<24x32xf32>
    %193 = vector.extract_strided_slice %151 {offsets = [0, 32], sizes = [24, 32], strides = [1, 1]} : vector<24x64xf32> to vector<24x32xf32>
    %194 = vector.extract_strided_slice %152 {offsets = [0, 32], sizes = [24, 32], strides = [1, 1]} : vector<24x64xf32> to vector<24x32xf32>
    %195 = vector.extract_strided_slice %153 {offsets = [0, 32], sizes = [24, 32], strides = [1, 1]} : vector<24x64xf32> to vector<24x32xf32>
    %196 = vector.extract_strided_slice %167 {offsets = [32, 32], sizes = [32, 32], strides = [1, 1]} : vector<64x64xf32> to vector<32x32xf32>
    %cst_84 = arith.constant dense<0.000000e+00> : vector<24x32xf32>
    %197 = tpu.matmul %193, %196, %cst_84 {dimension_numbers = #tpu.dot_dimension_numbers<[1], [0], [0], [1], [0, 0, 1, 1], [], []>} : vector<24x32xf32>, vector<32x32xf32>, vector<24x32xf32> -> vector<24x32xf32>
    %198 = vector.broadcast %166 : f32 to vector<24x32xf32>
    %199 = arith.mulf %197, %198 : vector<24x32xf32>
    %cst_85 = arith.constant 2.400000e+01 : f32
    %200 = vector.broadcast %cst_85 : f32 to vector<24x32xf32>
    %201 = arith.mulf %200, %195 : vector<24x32xf32>
    %202 = arith.addf %199, %201 : vector<24x32xf32>
    %cst_86 = arith.constant dense<0.000000e+00> : vector<32xf32>
    %203 = vector.multi_reduction <add>, %194, %cst_86 [0] : vector<24x32xf32> to vector<32xf32>
    %204 = vector.shape_cast %203 : vector<32xf32> to vector<1x32xf32>
    %205 = vector.broadcast %204 : vector<1x32xf32> to vector<24x32xf32>
    %206 = arith.mulf %193, %205 : vector<24x32xf32>
    %cst_87 = arith.constant dense<0.000000e+00> : vector<24xf32>
    %207 = vector.multi_reduction <add>, %206, %cst_87 [1] : vector<24x32xf32> to vector<24xf32>
    %208 = vector.shape_cast %207 : vector<24xf32> to vector<24x1xf32>
    %209 = vector.broadcast %166 : f32 to vector<24x1xf32>
    %210 = arith.mulf %208, %209 : vector<24x1xf32>
    %cst_88 = arith.constant 2.400000e+01 : f32
    %211 = vector.broadcast %cst_88 : f32 to vector<24x1xf32>
    %212 = arith.addf %210, %211 : vector<24x1xf32>
    %213 = tpu.reciprocal %212 {approx = true} : vector<24x1xf32> -> vector<24x1xf32>
    %214 = vector.broadcast %213 : vector<24x1xf32> to vector<24x32xf32>
    %215 = arith.mulf %202, %214 : vector<24x32xf32>
    %216 = arith.addf %192, %215 : vector<24x32xf32>
    %cst_89 = arith.constant 5.000000e-01 : f32
    %217 = vector.broadcast %cst_89 : f32 to vector<24x32xf32>
    %218 = arith.mulf %216, %217 : vector<24x32xf32>
    %cst_90 = arith.constant 5.000000e-01 : f32
    %219 = vector.broadcast %cst_90 : f32 to vector<24x32xf32>
    %220 = arith.mulf %219, %218 : vector<24x32xf32>
    %cst_91 = arith.constant 5.000000e-01 : f32
    %221 = vector.broadcast %cst_91 : f32 to vector<24x32xf32>
    %222 = arith.mulf %221, %147 : vector<24x32xf32>
    %223 = arith.addf %220, %222 : vector<24x32xf32>
    %cst_92 = arith.constant dense<0.000000e+00> : vector<24xf32>
    %224 = vector.multi_reduction <add>, %223, %cst_92 [1] : vector<24x32xf32> to vector<24xf32>
    %225 = vector.shape_cast %224 : vector<24xf32> to vector<24x1xf32>
    %cst_93 = arith.constant 3.200000e+01 : f32
    %226 = vector.broadcast %cst_93 : f32 to vector<24x1xf32>
    %227 = arith.divf %225, %226 : vector<24x1xf32>
    %228 = vector.broadcast %227 : vector<24x1xf32> to vector<24x32xf32>
    %229 = arith.subf %223, %228 : vector<24x32xf32>
    %230 = arith.mulf %229, %229 : vector<24x32xf32>
    %cst_94 = arith.constant dense<0.000000e+00> : vector<24xf32>
    %231 = vector.multi_reduction <add>, %230, %cst_94 [1] : vector<24x32xf32> to vector<24xf32>
    %232 = vector.shape_cast %231 : vector<24xf32> to vector<24x1xf32>
    %cst_95 = arith.constant 3.200000e+01 : f32
    %233 = vector.broadcast %cst_95 : f32 to vector<24x1xf32>
    %234 = arith.divf %232, %233 : vector<24x1xf32>
    %235 = vector.broadcast %227 : vector<24x1xf32> to vector<24x32xf32>
    %236 = arith.subf %223, %235 : vector<24x32xf32>
    %cst_96 = arith.constant 9.99999974E-6 : f32
    %237 = vector.broadcast %cst_96 : f32 to vector<24x1xf32>
    %238 = arith.addf %234, %237 : vector<24x1xf32>
    %239 = math.rsqrt %238 : vector<24x1xf32>
    %240 = vector.broadcast %239 : vector<24x1xf32> to vector<24x32xf32>
    %241 = arith.mulf %236, %240 : vector<24x32xf32>
    %242 = vector.broadcast %6 : vector<1x32xf32> to vector<24x32xf32>
    %243 = arith.mulf %241, %242 : vector<24x32xf32>
    %244 = vector.broadcast %7 : vector<1x32xf32> to vector<24x32xf32>
    %245 = arith.addf %243, %244 : vector<24x32xf32>
    %cst_97 = arith.constant dense<0.000000e+00> : vector<24x32xf32>
    %246 = tpu.matmul %21, %12, %cst_97 {dimension_numbers = #tpu.dot_dimension_numbers<[1], [0], [0], [1], [0, 0, 1, 1], [], []>} : vector<24x16xf32>, vector<16x32xf32>, vector<24x32xf32> -> vector<24x32xf32>
    %cst_98 = arith.constant dense<0.000000e+00> : vector<24x32xf32>
    %247 = tpu.matmul %22, %246, %cst_98 {dimension_numbers = #tpu.dot_dimension_numbers<[1], [0], [0], [1], [0, 0, 1, 1], [], []>} : vector<24x24xf32>, vector<24x32xf32>, vector<24x32xf32> -> vector<24x32xf32>
    %248 = vector.broadcast %13 : vector<1x32xf32> to vector<24x32xf32>
    %249 = arith.addf %247, %248 : vector<24x32xf32>
    %cst_99 = arith.constant dense<0.000000e+00> : vector<32xf32>
    %250 = vector.multi_reduction <add>, %249, %cst_99 [0] : vector<24x32xf32> to vector<32xf32>
    %251 = vector.shape_cast %250 : vector<32xf32> to vector<1x32xf32>
    %cst_100 = arith.constant 2.400000e+01 : f32
    %252 = vector.broadcast %cst_100 : f32 to vector<1x32xf32>
    %253 = arith.divf %251, %252 : vector<1x32xf32>
    %254 = vector.broadcast %253 : vector<1x32xf32> to vector<24x32xf32>
    %255 = arith.subf %249, %254 : vector<24x32xf32>
    %256 = arith.mulf %255, %255 : vector<24x32xf32>
    %cst_101 = arith.constant dense<0.000000e+00> : vector<32xf32>
    %257 = vector.multi_reduction <add>, %256, %cst_101 [0] : vector<24x32xf32> to vector<32xf32>
    %258 = vector.shape_cast %257 : vector<32xf32> to vector<1x32xf32>
    %cst_102 = arith.constant 2.400000e+01 : f32
    %259 = vector.broadcast %cst_102 : f32 to vector<1x32xf32>
    %260 = arith.divf %258, %259 : vector<1x32xf32>
    %261 = vector.broadcast %253 : vector<1x32xf32> to vector<24x32xf32>
    %262 = arith.subf %249, %261 : vector<24x32xf32>
    %cst_103 = arith.constant 9.99999974E-6 : f32
    %263 = vector.broadcast %cst_103 : f32 to vector<1x32xf32>
    %264 = arith.addf %260, %263 : vector<1x32xf32>
    %265 = math.rsqrt %264 : vector<1x32xf32>
    %266 = vector.broadcast %265 : vector<1x32xf32> to vector<24x32xf32>
    %267 = arith.mulf %262, %266 : vector<24x32xf32>
    %268 = vector.broadcast %16 : vector<1x32xf32> to vector<24x32xf32>
    %269 = arith.mulf %267, %268 : vector<24x32xf32>
    %270 = vector.broadcast %17 : vector<1x32xf32> to vector<24x32xf32>
    %271 = arith.addf %269, %270 : vector<24x32xf32>
    %cst_104 = arith.constant 0.000000e+00 : f32
    %272 = vector.broadcast %cst_104 : f32 to vector<24x32xf32>
    %273 = arith.maximumf %271, %272 : vector<24x32xf32>
    %cst_105 = arith.constant dense<0.000000e+00> : vector<24x32xf32>
    %274 = tpu.matmul %273, %14, %cst_105 {dimension_numbers = #tpu.dot_dimension_numbers<[1], [0], [0], [1], [0, 0, 1, 1], [], []>} : vector<24x32xf32>, vector<32x32xf32>, vector<24x32xf32> -> vector<24x32xf32>
    %cst_106 = arith.constant dense<0.000000e+00> : vector<24x32xf32>
    %275 = tpu.matmul %22, %274, %cst_106 {dimension_numbers = #tpu.dot_dimension_numbers<[1], [0], [0], [1], [0, 0, 1, 1], [], []>} : vector<24x24xf32>, vector<24x32xf32>, vector<24x32xf32> -> vector<24x32xf32>
    %276 = vector.broadcast %15 : vector<1x32xf32> to vector<24x32xf32>
    %277 = arith.addf %275, %276 : vector<24x32xf32>
    %cst_107 = arith.constant 8.000000e-01 : f32
    %278 = vector.broadcast %cst_107 : f32 to vector<24x32xf32>
    %279 = arith.mulf %278, %277 : vector<24x32xf32>
    %cst_108 = arith.constant 2.000000e-01 : f32
    %280 = vector.broadcast %cst_108 : f32 to vector<24x32xf32>
    %281 = arith.mulf %280, %245 : vector<24x32xf32>
    %282 = arith.addf %279, %281 : vector<24x32xf32>
    %c0_109 = arith.constant 0 : index
    %c0_110 = arith.constant 0 : index
    %283 = vector.load %arg2[%c0_109, %c0_110] : memref<4x24xf32, #tpu.memory_space<vmem>>, vector<4x24xf32>
    %cst_111 = arith.constant dense<0.000000e+00> : vector<4x32xf32>
    %284 = tpu.matmul %283, %282, %cst_111 {dimension_numbers = #tpu.dot_dimension_numbers<[1], [0], [0], [1], [0, 0, 1, 1], [], []>} : vector<4x24xf32>, vector<24x32xf32>, vector<4x32xf32> -> vector<4x32xf32>
    %cst_112 = arith.constant dense<0.000000e+00> : vector<4x32xf32>
    %285 = tpu.matmul %284, %18, %cst_112 {dimension_numbers = #tpu.dot_dimension_numbers<[1], [0], [0], [1], [0, 0, 1, 1], [], []>} : vector<4x32xf32>, vector<32x32xf32>, vector<4x32xf32> -> vector<4x32xf32>
    %286 = vector.broadcast %19 : vector<1x32xf32> to vector<4x32xf32>
    %287 = arith.addf %285, %286 : vector<4x32xf32>
    %c0_113 = arith.constant 0 : index
    %c0_114 = arith.constant 0 : index
    %288 = vector.load %arg3[%c0_113, %c0_114] : memref<4x32xf32, #tpu.memory_space<vmem>>, vector<4x32xf32>
    %cst_115 = arith.constant dense<0.000000e+00> : vector<4x32xf32>
    %289 = tpu.matmul %288, %20, %cst_115 {dimension_numbers = #tpu.dot_dimension_numbers<[1], [0], [0], [1], [0, 0, 1, 1], [], []>} : vector<4x32xf32>, vector<32x32xf32>, vector<4x32xf32> -> vector<4x32xf32>
    %290 = arith.mulf %287, %287 : vector<4x32xf32>
    %cst_116 = arith.constant dense<0.000000e+00> : vector<4xf32>
    %291 = vector.multi_reduction <add>, %290, %cst_116 [1] : vector<4x32xf32> to vector<4xf32>
    %292 = vector.shape_cast %291 : vector<4xf32> to vector<4x1xf32>
    %293 = math.rsqrt %292 : vector<4x1xf32>
    %294 = vector.broadcast %293 : vector<4x1xf32> to vector<4x32xf32>
    %295 = arith.mulf %287, %294 : vector<4x32xf32>
    %296 = arith.mulf %289, %289 : vector<4x32xf32>
    %cst_117 = arith.constant dense<0.000000e+00> : vector<4xf32>
    %297 = vector.multi_reduction <add>, %296, %cst_117 [1] : vector<4x32xf32> to vector<4xf32>
    %298 = vector.shape_cast %297 : vector<4xf32> to vector<4x1xf32>
    %299 = math.rsqrt %298 : vector<4x1xf32>
    %300 = vector.broadcast %299 : vector<4x1xf32> to vector<4x32xf32>
    %301 = arith.mulf %289, %300 : vector<4x32xf32>
    %c0_118 = arith.constant 0 : index
    %c0_119 = arith.constant 0 : index
    %302 = memref.load %arg4[%c0_118, %c0_119] : memref<1x1xf32, #tpu.memory_space<smem>>
    %303 = math.exp %302 : f32
    %cst_120 = arith.constant dense<0.000000e+00> : vector<4x4xf32>
    %304 = tpu.matmul %295, %301, %cst_120 {dimension_numbers = #tpu.dot_dimension_numbers<[1], [1], [0], [0], [0, 0, 1, 0], [], []>} : vector<4x32xf32>, vector<4x32xf32>, vector<4x4xf32> -> vector<4x4xf32>
    %305 = vector.broadcast %303 : f32 to vector<4x4xf32>
    %306 = arith.mulf %305, %304 : vector<4x4xf32>
    %307 = tpu.iota {dimensions = array<i32: 0>} : vector<4x4xi32>
    %308 = tpu.iota {dimensions = array<i32: 1>} : vector<4x4xi32>
    %309 = arith.cmpi eq, %307, %308 : vector<4x4xi32>
    %cst_121 = arith.constant 0.000000e+00 : f32
    %310 = vector.broadcast %cst_121 : f32 to vector<4x4xf32>
    %311 = arith.select %309, %306, %310 : vector<4x4xi1>, vector<4x4xf32>
    %cst_122 = arith.constant dense<0xFF800000> : vector<4xf32>
    %312 = vector.multi_reduction <maximumf>, %306, %cst_122 [1] : vector<4x4xf32> to vector<4xf32>
    %313 = vector.shape_cast %312 : vector<4xf32> to vector<4x1xf32>
    %314 = vector.broadcast %313 : vector<4x1xf32> to vector<4x4xf32>
    %315 = arith.subf %306, %314 : vector<4x4xf32>
    %316 = math.exp %315 : vector<4x4xf32>
    %cst_123 = arith.constant dense<0.000000e+00> : vector<4xf32>
    %317 = vector.multi_reduction <add>, %316, %cst_123 [1] : vector<4x4xf32> to vector<4xf32>
    %318 = vector.shape_cast %317 : vector<4xf32> to vector<4x1xf32>
    %319 = math.log %318 : vector<4x1xf32>
    %320 = arith.addf %319, %313 : vector<4x1xf32>
    %cst_124 = arith.constant dense<0xFF800000> : vector<4xf32>
    %321 = vector.multi_reduction <maximumf>, %306, %cst_124 [0] : vector<4x4xf32> to vector<4xf32>
    %322 = vector.shape_cast %321 : vector<4xf32> to vector<1x4xf32>
    %323 = vector.broadcast %322 : vector<1x4xf32> to vector<4x4xf32>
    %324 = arith.subf %306, %323 : vector<4x4xf32>
    %325 = math.exp %324 : vector<4x4xf32>
    %cst_125 = arith.constant dense<0.000000e+00> : vector<4xf32>
    %326 = vector.multi_reduction <add>, %325, %cst_125 [0] : vector<4x4xf32> to vector<4xf32>
    %327 = vector.shape_cast %326 : vector<4xf32> to vector<1x4xf32>
    %328 = math.log %327 : vector<1x4xf32>
    %329 = arith.addf %328, %322 : vector<1x4xf32>
    %cst_126 = arith.constant dense<0.000000e+00> : vector<4xf32>
    %330 = vector.multi_reduction <add>, %311, %cst_126 [1] : vector<4x4xf32> to vector<4xf32>
    %331 = vector.shape_cast %330 : vector<4xf32> to vector<4x1xf32>
    %332 = arith.subf %320, %331 : vector<4x1xf32>
    %333 = vector.shape_cast %332 : vector<4x1xf32> to vector<1x4x1xf32>
    %cst_127 = arith.constant dense<0.000000e+00> : vector<1xf32>
    %334 = vector.multi_reduction <add>, %333, %cst_127 [1, 2] : vector<1x4x1xf32> to vector<1xf32>
    %335 = vector.shape_cast %334 : vector<1xf32> to vector<1x1x1xf32>
    %336 = vector.extract %335[0, 0, 0] : f32 from vector<1x1x1xf32>
    %cst_128 = arith.constant 4.000000e+00 : f32
    %337 = arith.divf %336, %cst_128 : f32
    %cst_129 = arith.constant dense<0.000000e+00> : vector<4xf32>
    %338 = vector.multi_reduction <add>, %311, %cst_129 [0] : vector<4x4xf32> to vector<4xf32>
    %339 = vector.shape_cast %338 : vector<4xf32> to vector<1x4xf32>
    %340 = arith.subf %329, %339 : vector<1x4xf32>
    %341 = vector.shape_cast %340 : vector<1x4xf32> to vector<1x1x4xf32>
    %cst_130 = arith.constant dense<0.000000e+00> : vector<1xf32>
    %342 = vector.multi_reduction <add>, %341, %cst_130 [1, 2] : vector<1x1x4xf32> to vector<1xf32>
    %343 = vector.shape_cast %342 : vector<1xf32> to vector<1x1x1xf32>
    %344 = vector.extract %343[0, 0, 0] : f32 from vector<1x1x1xf32>
    %cst_131 = arith.constant 4.000000e+00 : f32
    %345 = arith.divf %344, %cst_131 : f32
    %346 = arith.addf %337, %345 : f32
    %cst_132 = arith.constant 5.000000e-01 : f32
    %347 = arith.mulf %cst_132, %346 : f32
    %c0_133 = arith.constant 0 : index
    %c0_134 = arith.constant 0 : index
    %348 = memref.load %arg26[%c0_133, %c0_134] : memref<1x1xf32, #tpu.memory_space<smem>>
    memref.store %347, %arg26[%c0_133, %c0_134] : memref<1x1xf32, #tpu.memory_space<smem>>
    return
  }
}

</mosaic_0001>

<llo_original>
// kernel: tpu_custom_call.1
$region0: #{tpu_custom_call.1}
  #allocation0 [shape = 'u32[]', space=smem, size = 0x4, offset = 0x4, fixed_abs, tag = 'smem constant byte address 0x4 - core index']
  #allocation1 [shape = 'u32[72,128]{1,0:T(1,128)}', space=vmem, size = 0x9000, scoped, tag = 'internal scratch']
  #allocation2 [shape = 'f32[1,1]{1,0:T(1,128)S(6)}', space=smem, size = 0x200, scoped, tag = 'scoped memory for tpu_custom_call.1']
  %s0 = inlined_call_operand.vmem [shape: f32[24,16], index: 0, kind: input, shape index: {}]
  %s1 = inlined_call_operand.hbm [shape: f32[24,24], index: 1, kind: input, shape index: {}]
  %s2 = inlined_call_operand.hbm [shape: f32[4,24], index: 2, kind: input, shape index: {}]
  %s3 = inlined_call_operand.hbm [shape: f32[4,32], index: 3, kind: input, shape index: {}]
  %s4 = inlined_call_operand.<no memory space> [shape: f32[1,1], index: 4, kind: input, shape index: {}]
  %s5 = inlined_call_operand.hbm [shape: f32[16,32], index: 5, kind: input, shape index: {}]
  %s6 = inlined_call_operand.hbm [shape: f32[1,32], index: 6, kind: input, shape index: {}]
  %s7 = inlined_call_operand.hbm [shape: f32[1,32], index: 7, kind: input, shape index: {}]
  %s8 = inlined_call_operand.hbm [shape: f32[1,32], index: 8, kind: input, shape index: {}]
  %s9 = inlined_call_operand.hbm [shape: f32[1,32], index: 9, kind: input, shape index: {}]
  %s10 = inlined_call_operand.hbm [shape: f32[1,32], index: 10, kind: input, shape index: {}]
  %s11 = inlined_call_operand.hbm [shape: f32[1,32], index: 11, kind: input, shape index: {}]
  %s12 = inlined_call_operand.hbm [shape: f32[1,32], index: 12, kind: input, shape index: {}]
  %s13 = inlined_call_operand.hbm [shape: f32[32,192], index: 13, kind: input, shape index: {}]
  %s14 = inlined_call_operand.hbm [shape: f32[1,192], index: 14, kind: input, shape index: {}]
  %s15 = inlined_call_operand.hbm [shape: f32[32,192], index: 15, kind: input, shape index: {}]
  %s16 = inlined_call_operand.hbm [shape: f32[1,192], index: 16, kind: input, shape index: {}]
  %s17 = inlined_call_operand.hbm [shape: f32[16,32], index: 17, kind: input, shape index: {}]
  %s18 = inlined_call_operand.hbm [shape: f32[1,32], index: 18, kind: input, shape index: {}]
  %s19 = inlined_call_operand.vmem [shape: f32[32,32], index: 19, kind: input, shape index: {}]
  %s20 = inlined_call_operand.hbm [shape: f32[1,32], index: 20, kind: input, shape index: {}]
  %s21 = inlined_call_operand.hbm [shape: f32[1,32], index: 21, kind: input, shape index: {}]
  %s22 = inlined_call_operand.hbm [shape: f32[1,32], index: 22, kind: input, shape index: {}]
  %s23 = inlined_call_operand.hbm [shape: f32[32,32], index: 23, kind: input, shape index: {}]
  %s24 = inlined_call_operand.hbm [shape: f32[1,32], index: 24, kind: input, shape index: {}]
  %s25 = inlined_call_operand.vmem [shape: f32[32,32], index: 25, kind: input, shape index: {}]
  %s26 = inlined_call_operand.hbm [shape: f32[1,1], index: 26, kind: output, shape index: {}]
  %s27 = sld [smem:[#allocation0]]
  $region202: #{tpu_custom_call.1} parent=0
    _
  %s29 = ssub.s32 1, %s27
  %s30 = scalar_select 0, %s29, %s27
  %31 = sst [smem:[#allocation2]] %s4
  $region1: #{tpu_custom_call.1} parent=0
    #allocation3 [shape = 'u8[12288]{0}', space=vmem, size = 0x3000, scoped, tag = 'input window, operand 1, single buffered']
    #allocation4 [shape = 's32[1]{0}', space=sflag, size = 0x4, scoped, tag = 'scoped memory for tpu_custom_call.1']
    #allocation5 [shape = 's32[1]{0}', space=sflag, size = 0x4, scoped, tag = 'scoped memory for tpu_custom_call.1']
    #allocation6 [shape = 'u8[2048]{0}', space=vmem, size = 0x800, scoped, tag = 'input window, operand 2, single buffered']
    #allocation7 [shape = 's32[1]{0}', space=sflag, size = 0x4, scoped, tag = 'scoped memory for tpu_custom_call.1']
    #allocation8 [shape = 'u8[2048]{0}', space=vmem, size = 0x800, scoped, tag = 'input window, operand 3, single buffered']
    #allocation9 [shape = 'u8[8192]{0}', space=vmem, size = 0x2000, scoped, tag = 'input window, operand 5, single buffered']
    #allocation10 [shape = 's32[1]{0}', space=sflag, size = 0x4, scoped, tag = 'scoped memory for tpu_custom_call.1']
    #allocation11 [shape = 'u8[512]{0}', space=vmem, size = 0x400, scoped, tag = 'input window, operand 6, single buffered']
    #allocation12 [shape = 'u8[512]{0}', space=vmem, size = 0x400, scoped, tag = 'input window, operand 7, single buffered']
    #allocation13 [shape = 's32[1]{0}', space=sflag, size = 0x4, scoped, tag = 'scoped memory for tpu_custom_call.1']
    #allocation14 [shape = 'u8[512]{0}', space=vmem, size = 0x400, scoped, tag = 'input window, operand 8, single buffered']
    #allocation15 [shape = 'u8[512]{0}', space=vmem, size = 0x400, scoped, tag = 'input window, operand 9, single buffered']
    #allocation16 [shape = 's32[1]{0}', space=sflag, size = 0x4, scoped, tag = 'scoped memory for tpu_custom_call.1']
    #allocation17 [shape = 'u8[512]{0}', space=vmem, size = 0x400, scoped, tag = 'input window, operand 10, single buffered']
    #allocation18 [shape = 'u8[512]{0}', space=vmem, size = 0x400, scoped, tag = 'input window, operand 11, single buffered']
    #allocation19 [shape = 's32[1]{0}', space=sflag, size = 0x4, scoped, tag = 'scoped memory for tpu_custom_call.1']
    #allocation20 [shape = 'u8[512]{0}', space=vmem, size = 0x400, scoped, tag = 'input window, operand 12, single buffered']
    #allocation21 [shape = 'u8[32768]{0}', space=vmem, size = 0x8000, scoped, tag = 'input window, operand 13, single buffered']
    #allocation22 [shape = 's32[1]{0}', space=sflag, size = 0x4, scoped, tag = 'scoped memory for tpu_custom_call.1']
    #allocation23 [shape = 'u8[1024]{0}', space=vmem, size = 0x400, scoped, tag = 'input window, operand 14, single buffered']
    #allocation24 [shape = 'u8[32768]{0}', space=vmem, size = 0x8000, scoped, tag = 'input window, operand 15, single buffered']
    #allocation25 [shape = 's32[1]{0}', space=sflag, size = 0x4, scoped, tag = 'scoped memory for tpu_custom_call.1']
    #allocation26 [shape = 'u8[1024]{0}', space=vmem, size = 0x400, scoped, tag = 'input window, operand 16, single buffered']
    #allocation27 [shape = 'u8[8192]{0}', space=vmem, size = 0x2000, scoped, tag = 'input window, operand 17, single buffered']
    #allocation28 [shape = 's32[1]{0}', space=sflag, size = 0x4, scoped, tag = 'scoped memory for tpu_custom_call.1']
    #allocation29 [shape = 'u8[512]{0}', space=vmem, size = 0x400, scoped, tag = 'input window, operand 18, single buffered']
    #allocation30 [shape = 'u8[512]{0}', space=vmem, size = 0x400, scoped, tag = 'input window, operand 20, single buffered']
    #allocation31 [shape = 's32[1]{0}', space=sflag, size = 0x4, scoped, tag = 'scoped memory for tpu_custom_call.1']
    #allocation32 [shape = 'u8[512]{0}', space=vmem, size = 0x400, scoped, tag = 'input window, operand 21, single buffered']
    #allocation33 [shape = 'u8[512]{0}', space=vmem, size = 0x400, scoped, tag = 'input window, operand 22, single buffered']
    #allocation34 [shape = 's32[1]{0}', space=sflag, size = 0x4, scoped, tag = 'scoped memory for tpu_custom_call.1']
    #allocation35 [shape = 'u8[16384]{0}', space=vmem, size = 0x4000, scoped, tag = 'input window, operand 23, single buffered']
    #allocation36 [shape = 'u8[512]{0}', space=vmem, size = 0x400, scoped, tag = 'input window, operand 24, single buffered']
    #allocation37 [shape = 's32[1]{0}', space=sflag, size = 0x4, scoped, tag = 'scoped memory for tpu_custom_call.1']
    #allocation38 [shape = 'u8[512]{0}', space=smem, size = 0x200, scoped, tag = 'output window, operand 0, single buffered']
    %32 = vsyncpa [#allocation4], 0
    %33 = vsyncpa [#allocation7], 0
    %34 = vsyncpa [#allocation10], 0
    %35 = vsyncpa [#allocation13], 0
    %36 = vsyncpa [#allocation16], 0
    %37 = vsyncpa [#allocation19], 0
    %38 = vsyncpa [#allocation22], 0
    %39 = vsyncpa [#allocation25], 0
    %40 = vsyncpa [#allocation28], 0
    %41 = vsyncpa [#allocation31], 0
    %42 = vsyncpa [#allocation34], 0
    %43 = vsyncpa [#allocation37], 0
    %44 = vsyncpa [#allocation5], 0
    // Predicated region
    $region2: #{tpu_custom_call.1} parent=1 // pred_check
      _
    $region3: #{tpu_custom_call.1} parent=1 // pred_check_branch
      %46 = sbr.rel (0) target = $region5
    $region4: #{tpu_custom_call.1} parent=1 // pred_region
      _
    $region5: #{tpu_custom_call.1} parent=1 // pred_fallthru
      _
    // Predicated region
    $region6: #{tpu_custom_call.1} parent=1 // pred_check
      _
    $region7: #{tpu_custom_call.1} parent=1 // pred_check_branch
      %48 = sbr.rel (0) target = $region9
    $region8: #{tpu_custom_call.1} parent=1 // pred_region
      %50 = vsyncadd [#allocation4], 0
      %s51 = sshll.u32 %s1, 4
      %s52 = int_to_ptr.hbm [resolvable:$true] %s51
      %s53 = sshll.u32 [#allocation3], 4
      %s54 = int_to_ptr.vmem [resolvable:$true] %s53
      %59 = dma.hbm_to_vmem [thread:$0]  %s52, 384, %s54, [#allocation4], 128, 128, 8
    $region9: #{tpu_custom_call.1} parent=1 // pred_fallthru
      _
    // Predicated region
    $region10: #{tpu_custom_call.1} parent=1 // pred_check
      _
    $region11: #{tpu_custom_call.1} parent=1 // pred_check_branch
      %61 = sbr.rel (0) target = $region13
    $region12: #{tpu_custom_call.1} parent=1 // pred_region
      %63 = vsyncadd [#allocation7], 0
      %s65 = sshll.u32 %s2, 4
      %s66 = int_to_ptr.hbm [resolvable:$true] %s65
      %s67 = sshll.u32 [#allocation6], 4
      %s68 = int_to_ptr.vmem [resolvable:$true] %s67
      %70 = dma.hbm_to_vmem [thread:$0]  %s66, 64, %s68, [#allocation7]
    $region13: #{tpu_custom_call.1} parent=1 // pred_fallthru
      _
    // Predicated region
    $region14: #{tpu_custom_call.1} parent=1 // pred_check
      _
    $region15: #{tpu_custom_call.1} parent=1 // pred_check_branch
      %72 = sbr.rel (0) target = $region17
    $region16: #{tpu_custom_call.1} parent=1 // pred_region
      %74 = vsyncadd [#allocation7], 0
      %s76 = sshll.u32 %s3, 4
      %s77 = int_to_ptr.hbm [resolvable:$true] %s76
      %s78 = sshll.u32 [#allocation8], 4
      %s79 = int_to_ptr.vmem [resolvable:$true] %s78
      %81 = dma.hbm_to_vmem [thread:$0]  %s77, 64, %s79, [#allocation7]
    $region17: #{tpu_custom_call.1} parent=1 // pred_fallthru
      _
    // Predicated region
    $region18: #{tpu_custom_call.1} parent=1 // pred_check
      _
    $region19: #{tpu_custom_call.1} parent=1 // pred_check_branch
      %83 = sbr.rel (0) target = $region21
    $region20: #{tpu_custom_call.1} parent=1 // pred_region
      _
    $region21: #{tpu_custom_call.1} parent=1 // pred_fallthru
      _
    // Predicated region
    $region22: #{tpu_custom_call.1} parent=1 // pred_check
      _
    $region23: #{tpu_custom_call.1} parent=1 // pred_check_branch
      %85 = sbr.rel (0) target = $region25
    $region24: #{tpu_custom_call.1} parent=1 // pred_region
      %87 = vsyncadd [#allocation10], 0
      %s88 = sshll.u32 %s5, 4
      %s89 = int_to_ptr.hbm [resolvable:$true] %s88
      %s90 = sshll.u32 [#allocation9], 4
      %s91 = int_to_ptr.vmem [resolvable:$true] %s90
      %96 = dma.hbm_to_vmem [thread:$0]  %s89, 256, %s91, [#allocation10], 128, 128, 8
    $region25: #{tpu_custom_call.1} parent=1 // pred_fallthru
      _
    // Predicated region
    $region26: #{tpu_custom_call.1} parent=1 // pred_check
      _
    $region27: #{tpu_custom_call.1} parent=1 // pred_check_branch
      %98 = sbr.rel (0) target = $region29
    $region28: #{tpu_custom_call.1} parent=1 // pred_region
      %100 = vsyncadd [#allocation10], 0
      %s102 = sshll.u32 %s6, 4
      %s103 = int_to_ptr.hbm [resolvable:$true] %s102
      %s104 = sshll.u32 [#allocation11], 4
      %s105 = int_to_ptr.vmem [resolvable:$true] %s104
      %107 = dma.hbm_to_vmem [thread:$0]  %s103, 16, %s105, [#allocation10]
    $region29: #{tpu_custom_call.1} parent=1 // pred_fallthru
      _
    // Predicated region
    $region30: #{tpu_custom_call.1} parent=1 // pred_check
      _
    $region31: #{tpu_custom_call.1} parent=1 // pred_check_branch
      %109 = sbr.rel (0) target = $region33
    $region32: #{tpu_custom_call.1} parent=1 // pred_region
      %111 = vsyncadd [#allocation13], 0
      %s113 = sshll.u32 %s7, 4
      %s114 = int_to_ptr.hbm [resolvable:$true] %s113
      %s115 = sshll.u32 [#allocation12], 4
      %s116 = int_to_ptr.vmem [resolvable:$true] %s115
      %118 = dma.hbm_to_vmem [thread:$0]  %s114, 16, %s116, [#allocation13]
    $region33: #{tpu_custom_call.1} parent=1 // pred_fallthru
      _
    // Predicated region
    $region34: #{tpu_custom_call.1} parent=1 // pred_check
      _
    $region35: #{tpu_custom_call.1} parent=1 // pred_check_branch
      %120 = sbr.rel (0) target = $region37
    $region36: #{tpu_custom_call.1} parent=1 // pred_region
      %122 = vsyncadd [#allocation13], 0
      %s124 = sshll.u32 %s8, 4
      %s125 = int_to_ptr.hbm [resolvable:$true] %s124
      %s126 = sshll.u32 [#allocation14], 4
      %s127 = int_to_ptr.vmem [resolvable:$true] %s126
      %129 = dma.hbm_to_vmem [thread:$0]  %s125, 16, %s127, [#allocation13]
    $region37: #{tpu_custom_call.1} parent=1 // pred_fallthru
      _
    // Predicated region
    $region38: #{tpu_custom_call.1} parent=1 // pred_check
      _
    $region39: #{tpu_custom_call.1} parent=1 // pred_check_branch
      %131 = sbr.rel (0) target = $region41
    $region40: #{tpu_custom_call.1} parent=1 // pred_region
      %133 = vsyncadd [#allocation16], 0
      %s135 = sshll.u32 %s9, 4
      %s136 = int_to_ptr.hbm [resolvable:$true] %s135
      %s137 = sshll.u32 [#allocation15], 4
      %s138 = int_to_ptr.vmem [resolvable:$true] %s137
      %140 = dma.hbm_to_vmem [thread:$0]  %s136, 16, %s138, [#allocation16]
    $region41: #{tpu_custom_call.1} parent=1 // pred_fallthru
      _
    // Predicated region
    $region42: #{tpu_custom_call.1} parent=1 // pred_check
      _
    $region43: #{tpu_custom_call.1} parent=1 // pred_check_branch
      %142 = sbr.rel (0) target = $region45
    $region44: #{tpu_custom_call.1} parent=1 // pred_region
      %144 = vsyncadd [#allocation16], 0
      %s146 = sshll.u32 %s10, 4
      %s147 = int_to_ptr.hbm [resolvable:$true] %s146
      %s148 = sshll.u32 [#allocation17], 4
      %s149 = int_to_ptr.vmem [resolvable:$true] %s148
      %151 = dma.hbm_to_vmem [thread:$0]  %s147, 16, %s149, [#allocation16]
    $region45: #{tpu_custom_call.1} parent=1 // pred_fallthru
      _
    // Predicated region
    $region46: #{tpu_custom_call.1} parent=1 // pred_check
      _
    $region47: #{tpu_custom_call.1} parent=1 // pred_check_branch
      %153 = sbr.rel (0) target = $region49
    $region48: #{tpu_custom_call.1} parent=1 // pred_region
      %155 = vsyncadd [#allocation19], 0
      %s157 = sshll.u32 %s11, 4
      %s158 = int_to_ptr.hbm [resolvable:$true] %s157
      %s159 = sshll.u32 [#allocation18], 4
      %s160 = int_to_ptr.vmem [resolvable:$true] %s159
      %162 = dma.hbm_to_vmem [thread:$0]  %s158, 16, %s160, [#allocation19]
    $region49: #{tpu_custom_call.1} parent=1 // pred_fallthru
      _
    // Predicated region
    $region50: #{tpu_custom_call.1} parent=1 // pred_check
      _
    $region51: #{tpu_custom_call.1} parent=1 // pred_check_branch
      %164 = sbr.rel (0) target = $region53
    $region52: #{tpu_custom_call.1} parent=1 // pred_region
      %166 = vsyncadd [#allocation19], 0
      %s168 = sshll.u32 %s12, 4
      %s169 = int_to_ptr.hbm [resolvable:$true] %s168
      %s170 = sshll.u32 [#allocation20], 4
      %s171 = int_to_ptr.vmem [resolvable:$true] %s170
      %173 = dma.hbm_to_vmem [thread:$0]  %s169, 16, %s171, [#allocation19]
    $region53: #{tpu_custom_call.1} parent=1 // pred_fallthru
      _
    // Predicated region
    $region54: #{tpu_custom_call.1} parent=1 // pred_check
      _
    $region55: #{tpu_custom_call.1} parent=1 // pred_check_branch
      %175 = sbr.rel (0) target = $region57
    $region56: #{tpu_custom_call.1} parent=1 // pred_region
      %177 = vsyncadd [#allocation22], 0
      %s178 = sshll.u32 %s13, 4
      %s179 = int_to_ptr.hbm [resolvable:$true] %s178
      %s180 = sshll.u32 [#allocation21], 4
      %s181 = int_to_ptr.vmem [resolvable:$true] %s180
      %186 = dma.hbm_to_vmem [thread:$0]  %s179, 1024, %s181, [#allocation22], 256, 256, 16
    $region57: #{tpu_custom_call.1} parent=1 // pred_fallthru
      _
    // Predicated region
    $region58: #{tpu_custom_call.1} parent=1 // pred_check
      _
    $region59: #{tpu_custom_call.1} parent=1 // pred_check_branch
      %188 = sbr.rel (0) target = $region61
    $region60: #{tpu_custom_call.1} parent=1 // pred_region
      %190 = vsyncadd [#allocation22], 0
      %s192 = sshll.u32 %s14, 4
      %s193 = int_to_ptr.hbm [resolvable:$true] %s192
      %s194 = sshll.u32 [#allocation23], 4
      %s195 = int_to_ptr.vmem [resolvable:$true] %s194
      %197 = dma.hbm_to_vmem [thread:$0]  %s193, 32, %s195, [#allocation22]
    $region61: #{tpu_custom_call.1} parent=1 // pred_fallthru
      _
    // Predicated region
    $region62: #{tpu_custom_call.1} parent=1 // pred_check
      _
    $region63: #{tpu_custom_call.1} parent=1 // pred_check_branch
      %199 = sbr.rel (0) target = $region65
    $region64: #{tpu_custom_call.1} parent=1 // pred_region
      %201 = vsyncadd [#allocation25], 0
      %s202 = sshll.u32 %s15, 4
      %s203 = int_to_ptr.hbm [resolvable:$true] %s202
      %s204 = sshll.u32 [#allocation24], 4
      %s205 = int_to_ptr.vmem [resolvable:$true] %s204
      %210 = dma.hbm_to_vmem [thread:$0]  %s203, 1024, %s205, [#allocation25], 256, 256, 16
    $region65: #{tpu_custom_call.1} parent=1 // pred_fallthru
      _
    // Predicated region
    $region66: #{tpu_custom_call.1} parent=1 // pred_check
      _
    $region67: #{tpu_custom_call.1} parent=1 // pred_check_branch
      %212 = sbr.rel (0) target = $region69
    $region68: #{tpu_custom_call.1} parent=1 // pred_region
      %214 = vsyncadd [#allocation25], 0
      %s216 = sshll.u32 %s16, 4
      %s217 = int_to_ptr.hbm [resolvable:$true] %s216
      %s218 = sshll.u32 [#allocation26], 4
      %s219 = int_to_ptr.vmem [resolvable:$true] %s218
      %221 = dma.hbm_to_vmem [thread:$0]  %s217, 32, %s219, [#allocation25]
    $region69: #{tpu_custom_call.1} parent=1 // pred_fallthru
      _
    // Predicated region
    $region70: #{tpu_custom_call.1} parent=1 // pred_check
      _
    $region71: #{tpu_custom_call.1} parent=1 // pred_check_branch
      %223 = sbr.rel (0) target = $region73
    $region72: #{tpu_custom_call.1} parent=1 // pred_region
      %225 = vsyncadd [#allocation28], 0
      %s226 = sshll.u32 %s17, 4
      %s227 = int_to_ptr.hbm [resolvable:$true] %s226
      %s228 = sshll.u32 [#allocation27], 4
      %s229 = int_to_ptr.vmem [resolvable:$true] %s228
      %234 = dma.hbm_to_vmem [thread:$0]  %s227, 256, %s229, [#allocation28], 128, 128, 8
    $region73: #{tpu_custom_call.1} parent=1 // pred_fallthru
      _
    // Predicated region
    $region74: #{tpu_custom_call.1} parent=1 // pred_check
      _
    $region75: #{tpu_custom_call.1} parent=1 // pred_check_branch
      %236 = sbr.rel (0) target = $region77
    $region76: #{tpu_custom_call.1} parent=1 // pred_region
      %238 = vsyncadd [#allocation28], 0
      %s240 = sshll.u32 %s18, 4
      %s241 = int_to_ptr.hbm [resolvable:$true] %s240
      %s242 = sshll.u32 [#allocation29], 4
      %s243 = int_to_ptr.vmem [resolvable:$true] %s242
      %245 = dma.hbm_to_vmem [thread:$0]  %s241, 16, %s243, [#allocation28]
    $region77: #{tpu_custom_call.1} parent=1 // pred_fallthru
      _
    // Predicated region
    $region78: #{tpu_custom_call.1} parent=1 // pred_check
      _
    $region79: #{tpu_custom_call.1} parent=1 // pred_check_branch
      %247 = sbr.rel (0) target = $region81
    $region80: #{tpu_custom_call.1} parent=1 // pred_region
      _
    $region81: #{tpu_custom_call.1} parent=1 // pred_fallthru
      _
    // Predicated region
    $region82: #{tpu_custom_call.1} parent=1 // pred_check
      _
    $region83: #{tpu_custom_call.1} parent=1 // pred_check_branch
      %249 = sbr.rel (0) target = $region85
    $region84: #{tpu_custom_call.1} parent=1 // pred_region
      %251 = vsyncadd [#allocation31], 0
      %s253 = sshll.u32 %s20, 4
      %s254 = int_to_ptr.hbm [resolvable:$true] %s253
      %s255 = sshll.u32 [#allocation30], 4
      %s256 = int_to_ptr.vmem [resolvable:$true] %s255
      %258 = dma.hbm_to_vmem [thread:$0]  %s254, 16, %s256, [#allocation31]
    $region85: #{tpu_custom_call.1} parent=1 // pred_fallthru
      _
    // Predicated region
    $region86: #{tpu_custom_call.1} parent=1 // pred_check
      _
    $region87: #{tpu_custom_call.1} parent=1 // pred_check_branch
      %260 = sbr.rel (0) target = $region89
    $region88: #{tpu_custom_call.1} parent=1 // pred_region
      %262 = vsyncadd [#allocation31], 0
      %s264 = sshll.u32 %s21, 4
      %s265 = int_to_ptr.hbm [resolvable:$true] %s264
      %s266 = sshll.u32 [#allocation32], 4
      %s267 = int_to_ptr.vmem [resolvable:$true] %s266
      %269 = dma.hbm_to_vmem [thread:$0]  %s265, 16, %s267, [#allocation31]
    $region89: #{tpu_custom_call.1} parent=1 // pred_fallthru
      _
    // Predicated region
    $region90: #{tpu_custom_call.1} parent=1 // pred_check
      _
    $region91: #{tpu_custom_call.1} parent=1 // pred_check_branch
      %271 = sbr.rel (0) target = $region93
    $region92: #{tpu_custom_call.1} parent=1 // pred_region
      %273 = vsyncadd [#allocation34], 0
      %s275 = sshll.u32 %s22, 4
      %s276 = int_to_ptr.hbm [resolvable:$true] %s275
      %s277 = sshll.u32 [#allocation33], 4
      %s278 = int_to_ptr.vmem [resolvable:$true] %s277
      %280 = dma.hbm_to_vmem [thread:$0]  %s276, 16, %s278, [#allocation34]
    $region93: #{tpu_custom_call.1} parent=1 // pred_fallthru
      _
    // Predicated region
    $region94: #{tpu_custom_call.1} parent=1 // pred_check
      _
    $region95: #{tpu_custom_call.1} parent=1 // pred_check_branch
      %282 = sbr.rel (0) target = $region97
    $region96: #{tpu_custom_call.1} parent=1 // pred_region
      %284 = vsyncadd [#allocation34], 0
      %s285 = sshll.u32 %s23, 4
      %s286 = int_to_ptr.hbm [resolvable:$true] %s285
      %s287 = sshll.u32 [#allocation35], 4
      %s288 = int_to_ptr.vmem [resolvable:$true] %s287
      %293 = dma.hbm_to_vmem [thread:$0]  %s286, 512, %s288, [#allocation34], 128, 128, 8
    $region97: #{tpu_custom_call.1} parent=1 // pred_fallthru
      _
    // Predicated region
    $region98: #{tpu_custom_call.1} parent=1 // pred_check
      _
    $region99: #{tpu_custom_call.1} parent=1 // pred_check_branch
      %295 = sbr.rel (0) target = $region101
    $region100: #{tpu_custom_call.1} parent=1 // pred_region
      %297 = vsyncadd [#allocation37], 0
      %s299 = sshll.u32 %s24, 4
      %s300 = int_to_ptr.hbm [resolvable:$true] %s299
      %s301 = sshll.u32 [#allocation36], 4
      %s302 = int_to_ptr.vmem [resolvable:$true] %s301
      %304 = dma.hbm_to_vmem [thread:$0]  %s300, 16, %s302, [#allocation37]
    $region101: #{tpu_custom_call.1} parent=1 // pred_fallthru
      _
    // Predicated region
    $region102: #{tpu_custom_call.1} parent=1 // pred_check
      _
    $region103: #{tpu_custom_call.1} parent=1 // pred_check_branch
      %306 = sbr.rel (0) target = $region105
    $region104: #{tpu_custom_call.1} parent=1 // pred_region
      _
    $region105: #{tpu_custom_call.1} parent=1 // pred_fallthru
      _
    // Predicated region
    $region106: #{tpu_custom_call.1} parent=1 // pred_check
      _
    $region107: #{tpu_custom_call.1} parent=1 // pred_check_branch
      %308 = sbr.rel (0) target = $region109
    $region108: #{tpu_custom_call.1} parent=1 // pred_region
      %310 = dma.done [#allocation4], 384
    $region109: #{tpu_custom_call.1} parent=1 // pred_fallthru
      _
    // Predicated region
    $region110: #{tpu_custom_call.1} parent=1 // pred_check
      _
    $region111: #{tpu_custom_call.1} parent=1 // pred_check_branch
      %312 = sbr.rel (0) target = $region113
    $region112: #{tpu_custom_call.1} parent=1 // pred_region
      %314 = dma.done [#allocation7], 64
    $region113: #{tpu_custom_call.1} parent=1 // pred_fallthru
      _
    // Predicated region
    $region114: #{tpu_custom_call.1} parent=1 // pred_check
      _
    $region115: #{tpu_custom_call.1} parent=1 // pred_check_branch
      %316 = sbr.rel (0) target = $region117
    $region116: #{tpu_custom_call.1} parent=1 // pred_region
      %318 = dma.done [#allocation7], 64
    $region117: #{tpu_custom_call.1} parent=1 // pred_fallthru
      _
    // Predicated region
    $region118: #{tpu_custom_call.1} parent=1 // pred_check
      _
    $region119: #{tpu_custom_call.1} parent=1 // pred_check_branch
      %320 = sbr.rel (0) target = $region121
    $region120: #{tpu_custom_call.1} parent=1 // pred_region
      %322 = dma.done [#allocation10], 256
    $region121: #{tpu_custom_call.1} parent=1 // pred_fallthru
      _
    // Predicated region
    $region122: #{tpu_custom_call.1} parent=1 // pred_check
      _
    $region123: #{tpu_custom_call.1} parent=1 // pred_check_branch
      %324 = sbr.rel (0) target = $region125
    $region124: #{tpu_custom_call.1} parent=1 // pred_region
      %326 = dma.done [#allocation10], 16
    $region125: #{tpu_custom_call.1} parent=1 // pred_fallthru
      _
    // Predicated region
    $region126: #{tpu_custom_call.1} parent=1 // pred_check
      _
    $region127: #{tpu_custom_call.1} parent=1 // pred_check_branch
      %328 = sbr.rel (0) target = $region129
    $region128: #{tpu_custom_call.1} parent=1 // pred_region
      %330 = dma.done [#allocation13], 16
    $region129: #{tpu_custom_call.1} parent=1 // pred_fallthru
      _
    // Predicated region
    $region130: #{tpu_custom_call.1} parent=1 // pred_check
      _
    $region131: #{tpu_custom_call.1} parent=1 // pred_check_branch
      %332 = sbr.rel (0) target = $region133
    $region132: #{tpu_custom_call.1} parent=1 // pred_region
      %334 = dma.done [#allocation13], 16
    $region133: #{tpu_custom_call.1} parent=1 // pred_fallthru
      _
    // Predicated region
    $region134: #{tpu_custom_call.1} parent=1 // pred_check
      _
    $region135: #{tpu_custom_call.1} parent=1 // pred_check_branch
      %336 = sbr.rel (0) target = $region137
    $region136: #{tpu_custom_call.1} parent=1 // pred_region
      %338 = dma.done [#allocation16], 16
    $region137: #{tpu_custom_call.1} parent=1 // pred_fallthru
      _
    // Predicated region
    $region138: #{tpu_custom_call.1} parent=1 // pred_check
      _
    $region139: #{tpu_custom_call.1} parent=1 // pred_check_branch
      %340 = sbr.rel (0) target = $region141
    $region140: #{tpu_custom_call.1} parent=1 // pred_region
      %342 = dma.done [#allocation16], 16
    $region141: #{tpu_custom_call.1} parent=1 // pred_fallthru
      _
    // Predicated region
    $region142: #{tpu_custom_call.1} parent=1 // pred_check
      _
    $region143: #{tpu_custom_call.1} parent=1 // pred_check_branch
      %344 = sbr.rel (0) target = $region145
    $region144: #{tpu_custom_call.1} parent=1 // pred_region
      %346 = dma.done [#allocation19], 16
    $region145: #{tpu_custom_call.1} parent=1 // pred_fallthru
      _
    // Predicated region
    $region146: #{tpu_custom_call.1} parent=1 // pred_check
      _
    $region147: #{tpu_custom_call.1} parent=1 // pred_check_branch
      %348 = sbr.rel (0) target = $region149
    $region148: #{tpu_custom_call.1} parent=1 // pred_region
      %350 = dma.done [#allocation19], 16
    $region149: #{tpu_custom_call.1} parent=1 // pred_fallthru
      _
    // Predicated region
    $region150: #{tpu_custom_call.1} parent=1 // pred_check
      _
    $region151: #{tpu_custom_call.1} parent=1 // pred_check_branch
      %352 = sbr.rel (0) target = $region153
    $region152: #{tpu_custom_call.1} parent=1 // pred_region
      %354 = dma.done [#allocation22], 1024
    $region153: #{tpu_custom_call.1} parent=1 // pred_fallthru
      _
    // Predicated region
    $region154: #{tpu_custom_call.1} parent=1 // pred_check
      _
    $region155: #{tpu_custom_call.1} parent=1 // pred_check_branch
      %356 = sbr.rel (0) target = $region157
    $region156: #{tpu_custom_call.1} parent=1 // pred_region
      %358 = dma.done [#allocation22], 32
    $region157: #{tpu_custom_call.1} parent=1 // pred_fallthru
      _
    // Predicated region
    $region158: #{tpu_custom_call.1} parent=1 // pred_check
      _
    $region159: #{tpu_custom_call.1} parent=1 // pred_check_branch
      %360 = sbr.rel (0) target = $region161
    $region160: #{tpu_custom_call.1} parent=1 // pred_region
      %362 = dma.done [#allocation25], 1024
    $region161: #{tpu_custom_call.1} parent=1 // pred_fallthru
      _
    // Predicated region
    $region162: #{tpu_custom_call.1} parent=1 // pred_check
      _
    $region163: #{tpu_custom_call.1} parent=1 // pred_check_branch
      %364 = sbr.rel (0) target = $region165
    $region164: #{tpu_custom_call.1} parent=1 // pred_region
      %366 = dma.done [#allocation25], 32
    $region165: #{tpu_custom_call.1} parent=1 // pred_fallthru
      _
    // Predicated region
    $region166: #{tpu_custom_call.1} parent=1 // pred_check
      _
    $region167: #{tpu_custom_call.1} parent=1 // pred_check_branch
      %368 = sbr.rel (0) target = $region169
    $region168: #{tpu_custom_call.1} parent=1 // pred_region
      %370 = dma.done [#allocation28], 256
    $region169: #{tpu_custom_call.1} parent=1 // pred_fallthru
      _
    // Predicated region
    $region170: #{tpu_custom_call.1} parent=1 // pred_check
      _
    $region171: #{tpu_custom_call.1} parent=1 // pred_check_branch
      %372 = sbr.rel (0) target = $region173
    $region172: #{tpu_custom_call.1} parent=1 // pred_region
      %374 = dma.done [#allocation28], 16
    $region173: #{tpu_custom_call.1} parent=1 // pred_fallthru
      _
    // Predicated region
    $region174: #{tpu_custom_call.1} parent=1 // pred_check
      _
    $region175: #{tpu_custom_call.1} parent=1 // pred_check_branch
      %376 = sbr.rel (0) target = $region177
    $region176: #{tpu_custom_call.1} parent=1 // pred_region
      %378 = dma.done [#allocation31], 16
    $region177: #{tpu_custom_call.1} parent=1 // pred_fallthru
      _
    // Predicated region
    $region178: #{tpu_custom_call.1} parent=1 // pred_check
      _
    $region179: #{tpu_custom_call.1} parent=1 // pred_check_branch
      %380 = sbr.rel (0) target = $region181
    $region180: #{tpu_custom_call.1} parent=1 // pred_region
      %382 = dma.done [#allocation31], 16
    $region181: #{tpu_custom_call.1} parent=1 // pred_fallthru
      _
    // Predicated region
    $region182: #{tpu_custom_call.1} parent=1 // pred_check
      _
    $region183: #{tpu_custom_call.1} parent=1 // pred_check_branch
      %384 = sbr.rel (0) target = $region185
    $region184: #{tpu_custom_call.1} parent=1 // pred_region
      %386 = dma.done [#allocation34], 16
    $region185: #{tpu_custom_call.1} parent=1 // pred_fallthru
      _
    // Predicated region
    $region186: #{tpu_custom_call.1} parent=1 // pred_check
      _
    $region187: #{tpu_custom_call.1} parent=1 // pred_check_branch
      %388 = sbr.rel (0) target = $region189
    $region188: #{tpu_custom_call.1} parent=1 // pred_region
      %390 = dma.done [#allocation34], 512
    $region189: #{tpu_custom_call.1} parent=1 // pred_fallthru
      _
    // Predicated region
    $region190: #{tpu_custom_call.1} parent=1 // pred_check
      _
    $region191: #{tpu_custom_call.1} parent=1 // pred_check_branch
      %392 = sbr.rel (0) target = $region193
    $region192: #{tpu_custom_call.1} parent=1 // pred_region
      %394 = dma.done [#allocation37], 16
    $region193: #{tpu_custom_call.1} parent=1 // pred_fallthru
      _
    %v395 = vld [vmem:[#allocation9] sm:$0xff]
    %v396 = vld [vmem:[#allocation9 + $0x8] sm:$0xff]
    %v397 = vld [vmem:[#allocation11] sm:$0x1]
    %v398 = vld [vmem:[#allocation12] sm:$0x1]
    %v399 = vld [vmem:[#allocation14] sm:$0x1]
    %v400 = vld [vmem:[#allocation15] sm:$0x1]
    %v401 = vld [vmem:[#allocation17] sm:$0x1]
    %v402 = vld [vmem:[#allocation18] sm:$0x1]
    %v403 = vld [vmem:[#allocation20] sm:$0x1]
    %v404 = vld [vmem:[#allocation21] sm:$0xff]
    %v405 = vld [vmem:[#allocation21 + $0x8] sm:$0xff]
    %v406 = vld [vmem:[#allocation21 + $0x10] sm:$0xff]
    %v407 = vld [vmem:[#allocation21 + $0x18] sm:$0xff]
    %v408 = vld [vmem:[#allocation21 + $0x20] sm:$0xff]
    %v409 = vld [vmem:[#allocation21 + $0x28] sm:$0xff]
    %v410 = vld [vmem:[#allocation21 + $0x30] sm:$0xff]
    %v411 = vld [vmem:[#allocation21 + $0x38] sm:$0xff]
    %v412 = vld [vmem:[#allocation23] sm:$0x3]
    %v413 = vld [vmem:[#allocation24] sm:$0xff]
    %v414 = vld [vmem:[#allocation24 + $0x8] sm:$0xff]
    %v415 = vld [vmem:[#allocation24 + $0x10] sm:$0xff]
    %v416 = vld [vmem:[#allocation24 + $0x18] sm:$0xff]
    %v417 = vld [vmem:[#allocation24 + $0x20] sm:$0xff]
    %v418 = vld [vmem:[#allocation24 + $0x28] sm:$0xff]
    %v419 = vld [vmem:[#allocation24 + $0x30] sm:$0xff]
    %v420 = vld [vmem:[#allocation24 + $0x38] sm:$0xff]
    %v421 = vld [vmem:[#allocation26] sm:$0x3]
    %v422 = vld [vmem:[#allocation27] sm:$0xff]
    %v423 = vld [vmem:[#allocation27 + $0x8] sm:$0xff]
    %v424 = vld [vmem:[#allocation29] sm:$0x1]
    %v425 = vld [vmem:[%s19] sm:$0xff]
    %v426 = vld [vmem:[%s19 + $0x8] sm:$0xff]
    %v427 = vld [vmem:[%s19 + $0x10] sm:$0xff]
    %v428 = vld [vmem:[%s19 + $0x18] sm:$0xff]
    %v429 = vld [vmem:[#allocation30] sm:$0x1]
    %v430 = vld [vmem:[#allocation32] sm:$0x1]
    %v431 = vld [vmem:[#allocation33] sm:$0x1]
    %v432 = vld [vmem:[#allocation35] sm:$0xff]
    %v433 = vld [vmem:[#allocation35 + $0x8] sm:$0xff]
    %v434 = vld [vmem:[#allocation35 + $0x10] sm:$0xff]
    %v435 = vld [vmem:[#allocation35 + $0x18] sm:$0xff]
    %v436 = vld [vmem:[#allocation36] sm:$0x1]
    %v437 = vld [vmem:[%s25] sm:$0xff]
    %v438 = vld [vmem:[%s25 + $0x8] sm:$0xff]
    %v439 = vld [vmem:[%s25 + $0x10] sm:$0xff]
    %v440 = vld [vmem:[%s25 + $0x18] sm:$0xff]
    %v441 = vld [vmem:[%s0] sm:$0xff]
    %v442 = vld [vmem:[%s0 + $0x8] sm:$0xff]
    %v443 = vld [vmem:[%s0 + $0x10] sm:$0xff]
    %v444 = vld [vmem:[#allocation3] sm:$0xff]
    %v445 = vld [vmem:[#allocation3 + $0x8] sm:$0xff]
    %v446 = vld [vmem:[#allocation3 + $0x10] sm:$0xff]
    %v448 = vperm.slane %v397, 0
    %vm450 = vcmask 130048
    %v452 = vsel %vm450, %v441, 0
    %v455 = vsel %vm450, %v442, 0
    %v458 = vsel %vm450, %v443, 0
    %460 = vmatpush.msra.mxu0 0.0
    %461 = vmatpush.msra.mxu0 0.0
    %462 = vmatpush.msra.mxu0 0.0
    %463 = vmatpush.msra.mxu0 0.0
    %464 = vmatpush.msra.mxu0 0.0
    %465 = vmatpush.msra.mxu0 0.0
    %466 = vmatpush.msra.mxu0 0.0
    %467 = vmatpush.msra.mxu0 0.0
    %468 = vmatpush.msra.mxu0 0.0
    %469 = vmatpush.msra.mxu0 0.0
    %470 = vmatpush.msra.mxu0 0.0
    %471 = vmatpush.msra.mxu0 0.0
    %472 = vmatpush.msra.mxu0 0.0
    %473 = vmatpush.msra.mxu0 0.0
    %474 = vmatpush.msra.mxu0 %v396
    %475 = vmatpush.msra.mxu0 %v395
    %476 = vmatmul.f32.gmra.mxu0 %v452
    %v477 = vpop.f32.mrf.mxu0
    %v478 = vadd.f32 %v448, %v477
    %479 = vmatmul.f32.gmra.mxu0 %v455
    %v480 = vpop.f32.mrf.mxu0
    %v481 = vadd.f32 %v448, %v480
    %482 = vmatmul.f32.gmra.mxu0 %v458
    %v483 = vpop.f32.mrf.mxu0
    %v484 = vadd.f32 %v448, %v483
    %485 = vdwg.mxu0
    %vm486 = vcmask 261120
    %v487 = vsel %vm486, %v478, 0.0
    %488 = vadd.xlane.f32.xlu0 %v487
    %v489 = vpop.xlane.xlu0 %488
    %v490 = vsel %vm486, %v481, 0.0
    %491 = vadd.xlane.f32.xlu0 %v490
    %v492 = vpop.xlane.xlu0 %491
    %v493 = vsel %vm486, %v484, 0.0
    %494 = vadd.xlane.f32.xlu0 %v493
    %v495 = vpop.xlane.xlu0 %494
    %v496 = vrcp.pop 32.0
    %v497 = vmul.f32 32.0, %v496
    %v498 = vsub.f32 1.0, %v497
    %v499 = vmul.f32 %v496, %v498
    %v500 = vadd.f32 %v496, %v499
    %vm501 = vweird.f32 %v496
    %v502 = vsel %vm501, %v496, %v500
    %v503 = vmul.f32 %v489, %v502
    %v504 = vmul.f32 %v492, %v502
    %v505 = vmul.f32 %v495, %v502
    %v506 = vsub.f32 %v478, %v503
    %v507 = vsub.f32 %v481, %v504
    %v508 = vsub.f32 %v484, %v505
    %v509 = vmul.f32 %v506, %v506
    %v510 = vmul.f32 %v507, %v507
    %v511 = vmul.f32 %v508, %v508
    %v512 = vsel %vm486, %v509, 0.0
    %513 = vadd.xlane.f32.xlu0 %v512
    %v514 = vpop.xlane.xlu0 %513
    %v515 = vsel %vm486, %v510, 0.0
    %516 = vadd.xlane.f32.xlu0 %v515
    %v517 = vpop.xlane.xlu0 %516
    %v518 = vsel %vm486, %v511, 0.0
    %519 = vadd.xlane.f32.xlu0 %v518
    %v520 = vpop.xlane.xlu0 %519
    %v521 = vmul.f32 %v514, %v502
    %v522 = vmul.f32 %v517, %v502
    %v523 = vmul.f32 %v520, %v502
    %v524 = vadd.f32 %v521, 1e-05
    %v525 = vadd.f32 %v522, 1e-05
    %v526 = vadd.f32 %v523, 1e-05
    %v527 = vrsqrt.pop %v524
    %v528 = vmul.f32 %v527, %v524
    %v529 = vmul.f32 %v528, %v527
    %v530 = vmul.f32 0.5, %v529
    %v531 = vsub.f32 1.5, %v530
    %v532 = vmul.f32 %v527, %v531
    %vm533 = vweird.f32 %v524
    %vm534 = vweird.f32 %v527
    %vm535 = vmor %vm533, %vm534
    %v536 = vsel %vm535, %v527, %v532
    %v537 = vrsqrt.pop %v525
    %v538 = vmul.f32 %v537, %v525
    %v539 = vmul.f32 %v538, %v537
    %v540 = vmul.f32 0.5, %v539
    %v541 = vsub.f32 1.5, %v540
    %v542 = vmul.f32 %v537, %v541
    %vm543 = vweird.f32 %v525
    %vm544 = vweird.f32 %v537
    %vm545 = vmor %vm543, %vm544
    %v546 = vsel %vm545, %v537, %v542
    %v547 = vrsqrt.pop %v526
    %v548 = vmul.f32 %v547, %v526
    %v549 = vmul.f32 %v548, %v547
    %v550 = vmul.f32 0.5, %v549
    %v551 = vsub.f32 1.5, %v550
    %v552 = vmul.f32 %v547, %v551
    %vm553 = vweird.f32 %v526
    %vm554 = vweird.f32 %v547
    %vm555 = vmor %vm553, %vm554
    %v556 = vsel %vm555, %v547, %v552
    %v557 = vmul.f32 %v506, %v536
    %v558 = vmul.f32 %v507, %v546
    %v559 = vmul.f32 %v508, %v556
    %v561 = vperm.slane %v398, 0
    %v563 = vmul.f32 %v557, %v561
    %v564 = vmul.f32 %v558, %v561
    %v565 = vmul.f32 %v559, %v561
    %v567 = vperm.slane %v399, 0
    %v569 = vadd.f32 %v563, %v567
    %v570 = vadd.f32 %v564, %v567
    %v571 = vadd.f32 %v565, %v567
    %v572 = vmax.f32 %v569, 0.0
    %v573 = vmax.f32 %v570, 0.0
    %v574 = vmax.f32 %v571, 0.0
    %v576 = vperm.slane %v412, 0
    %v577 = vperm.slane %v412, 1
    %v581 = vsel %vm486, %v572, 0
    %v584 = vsel %vm486, %v573, 0
    %v587 = vsel %vm486, %v574, 0
    %589 = vmatpush.msra.mxu0 0.0
    %590 = vmatpush.msra.mxu0 0.0
    %591 = vmatpush.msra.mxu0 0.0
    %592 = vmatpush.msra.mxu0 0.0
    %593 = vmatpush.msra.mxu0 0.0
    %594 = vmatpush.msra.mxu0 0.0
    %595 = vmatpush.msra.mxu0 0.0
    %596 = vmatpush.msra.mxu0 0.0
    %597 = vmatpush.msra.mxu0 0.0
    %598 = vmatpush.msra.mxu0 0.0
    %599 = vmatpush.msra.mxu0 0.0
    %600 = vmatpush.msra.mxu0 0.0
    %601 = vmatpush.msra.mxu0 %v410
    %602 = vmatpush.msra.mxu0 %v408
    %603 = vmatpush.msra.mxu0 %v406
    %604 = vmatpush.msra.mxu0 %v404
    %605 = vmatmul.f32.gmra.mxu0 %v581
    %v606 = vpop.f32.mrf.mxu0
    %v607 = vadd.f32 %v576, %v606
    %608 = vmatmul.f32.gmra.mxu0 %v584
    %v609 = vpop.f32.mrf.mxu0
    %v610 = vadd.f32 %v576, %v609
    %611 = vmatmul.f32.gmra.mxu0 %v587
    %v612 = vpop.f32.mrf.mxu0
    %v613 = vadd.f32 %v576, %v612
    %614 = vdwg.mxu0
    %615 = vmatpush.msra.mxu0 0.0
    %616 = vmatpush.msra.mxu0 0.0
    %617 = vmatpush.msra.mxu0 0.0
    %618 = vmatpush.msra.mxu0 0.0
    %619 = vmatpush.msra.mxu0 0.0
    %620 = vmatpush.msra.mxu0 0.0
    %621 = vmatpush.msra.mxu0 0.0
    %622 = vmatpush.msra.mxu0 0.0
    %623 = vmatpush.msra.mxu0 0.0
    %624 = vmatpush.msra.mxu0 0.0
    %625 = vmatpush.msra.mxu0 0.0
    %626 = vmatpush.msra.mxu0 0.0
    %627 = vmatpush.msra.mxu0 %v411
    %628 = vmatpush.msra.mxu0 %v409
    %629 = vmatpush.msra.mxu0 %v407
    %630 = vmatpush.msra.mxu0 %v405
    %631 = vmatmul.f32.gmra.mxu0 %v581
    %v632 = vpop.f32.mrf.mxu0
    %v633 = vadd.f32 %v577, %v632
    %634 = vmatmul.f32.gmra.mxu0 %v584
    %v635 = vpop.f32.mrf.mxu0
    %v636 = vadd.f32 %v577, %v635
    %637 = vmatmul.f32.gmra.mxu0 %v587
    %v638 = vpop.f32.mrf.mxu0
    %v639 = vadd.f32 %v577, %v638
    %640 = vdwg.mxu0
    %v641 = vmul.f32 %v607, %v607
    %v642 = vmul.f32 %v610, %v610
    %v643 = vmul.f32 %v613, %v613
    %vm644 = vcmask 523264
    %v645 = vsel %vm644, %v641, 0.0
    %v646 = vsel %vm644, %v642, 0.0
    %v647 = vadd.f32 %v645, %v646
    %v648 = vsel %vm644, %v643, 0.0
    %v649 = vadd.f32 %v647, %v648
    %650 = vadd.xlane.f32.xlu0 %v649
    %v651 = vpop.xlane.xlu0 %650
    %v652 = vrot.slane %v651, 4
    %v653 = vadd.f32 %v651, %v652
    %v654 = vrot.slane %v653, 2
    %v655 = vadd.f32 %v653, %v654
    %v656 = vrot.slane %v655, 1
    %v657 = vadd.f32 %v655, %v656
    %s658 = vtos %v657
    %v659 = vstv %s658
    %v660 = vrsqrt.pop %v659
    %v661 = vmul.f32 %v660, %v659
    %v662 = vmul.f32 %v661, %v660
    %v663 = vmul.f32 0.5, %v662
    %v664 = vsub.f32 1.5, %v663
    %v665 = vmul.f32 %v660, %v664
    %vm666 = vweird.f32 %v659
    %vm667 = vweird.f32 %v660
    %vm668 = vmor %vm666, %vm667
    %v669 = vsel %vm668, %v660, %v665
    %s670 = vtos %v669
    %674 = vrot.lane.b32.xlu0 %v641, 64
    %v675 = vpop.permute.xlu0 %674
    %676 = vrot.lane.b32.xlu0 %v642, 64
    %v677 = vpop.permute.xlu0 %676
    %678 = vrot.lane.b32.xlu0 %v643, 64
    %v679 = vpop.permute.xlu0 %678
    %v683 = vsel %vm644, %v675, 0.0
    %v684 = vsel %vm644, %v677, 0.0
    %v685 = vadd.f32 %v683, %v684
    %v686 = vsel %vm644, %v679, 0.0
    %v687 = vadd.f32 %v685, %v686
    %688 = vadd.xlane.f32.xlu0 %v687
    %v689 = vpop.xlane.xlu0 %688
    %v690 = vrot.slane %v689, 4
    %v691 = vadd.f32 %v689, %v690
    %v692 = vrot.slane %v691, 2
    %v693 = vadd.f32 %v691, %v692
    %v694 = vrot.slane %v693, 1
    %v695 = vadd.f32 %v693, %v694
    %s696 = vtos %v695
    %v697 = vstv %s696
    %v698 = vrsqrt.pop %v697
    %v699 = vmul.f32 %v698, %v697
    %v700 = vmul.f32 %v699, %v698
    %v701 = vmul.f32 0.5, %v700
    %v702 = vsub.f32 1.5, %v701
    %v703 = vmul.f32 %v698, %v702
    %vm704 = vweird.f32 %v697
    %vm705 = vweird.f32 %v698
    %vm706 = vmor %vm704, %vm705
    %v707 = vsel %vm706, %v698, %v703
    %s708 = vtos %v707
    %s709 = smul.f32 %s670, %s708
    %713 = vrot.lane.b32.xlu0 %v607, 64
    %v714 = vpop.permute.xlu0 %713
    %715 = vrot.lane.b32.xlu0 %v610, 64
    %v716 = vpop.permute.xlu0 %715
    %717 = vrot.lane.b32.xlu0 %v613, 64
    %v718 = vpop.permute.xlu0 %717
    %722 = vxpose.xlu0.b32.start [1/16] %v714, 128
    %723 = vxpose.xlu0.b32.cont [2/16] %v716, 128
    %724 = vxpose.xlu0.b32.cont [3/16] %v718, 128
    %725 = vxpose.xlu0.b32.cont [4/16] 0.0, 128
    %726 = vxpose.xlu0.b32.cont [5/16] 0.0, 128
    %727 = vxpose.xlu0.b32.cont [6/16] 0.0, 128
    %728 = vxpose.xlu0.b32.cont [7/16] 0.0, 128
    %729 = vxpose.xlu0.b32.cont [8/16] 0.0, 128
    %730 = vxpose.xlu0.b32.cont [9/16] 0.0, 128
    %731 = vxpose.xlu0.b32.cont [10/16] 0.0, 128
    %732 = vxpose.xlu0.b32.cont [11/16] 0.0, 128
    %733 = vxpose.xlu0.b32.cont [12/16] 0.0, 128
    %734 = vxpose.xlu0.b32.cont [13/16] 0.0, 128
    %735 = vxpose.xlu0.b32.cont [14/16] 0.0, 128
    %736 = vxpose.xlu0.b32.cont [15/16] 0.0, 128
    %737 = vxpose.xlu0.b32.end [16/16] 0.0, 128
    %v738 = vpop.trf.xlu0
    %v739 = vpop.trf.xlu0
    %v740 = vpop.trf.xlu0
    %v741 = vpop.trf.xlu0
    %v742 = vpop.trf.xlu0
    %v743 = vpop.trf.xlu0
    %v744 = vpop.trf.xlu0
    %v745 = vpop.trf.xlu0
    %v746 = vpop.trf.xlu0
    %v747 = vpop.trf.xlu0
    %v748 = vpop.trf.xlu0
    %v749 = vpop.trf.xlu0
    %v750 = vpop.trf.xlu0
    %v751 = vpop.trf.xlu0
    %v752 = vpop.trf.xlu0
    %v753 = vpop.trf.xlu0
    %vm754 = vcmask 195584
    %v756 = vsel %vm754, %v738, 0
    %v759 = vsel %vm754, %v739, 0
    %v762 = vsel %vm754, %v740, 0
    %v765 = vsel %vm754, %v741, 0
    %v768 = vsel %vm754, %v742, 0
    %v771 = vsel %vm754, %v743, 0
    %v774 = vsel %vm754, %v744, 0
    %v777 = vsel %vm754, %v745, 0
    %779 = vmatpush.msra.mxu0 0.0
    %780 = vmatpush.msra.mxu0 0.0
    %781 = vmatpush.msra.mxu0 0.0
    %782 = vmatpush.msra.mxu0 0.0
    %783 = vmatpush.msra.mxu0 0.0
    %784 = vmatpush.msra.mxu0 0.0
    %785 = vmatpush.msra.mxu0 0.0
    %786 = vmatpush.msra.mxu0 0.0
    %787 = vmatpush.msra.mxu0 0.0
    %788 = vmatpush.msra.mxu0 0.0
    %789 = vmatpush.msra.mxu0 0.0
    %790 = vmatpush.msra.mxu0 0.0
    %791 = vmatpush.msra.mxu0 0.0
    %792 = vmatpush.msra.mxu0 %v639
    %793 = vmatpush.msra.mxu0 %v636
    %794 = vmatpush.msra.mxu0 %v633
    %795 = vmatmul.f32.gmra.mxu0 %v756
    %v796 = vpop.f32.mrf.mxu0
    %v797 = vadd.f32 0.0, %v796
    %798 = vmatmul.f32.gmra.mxu0 %v759
    %v799 = vpop.f32.mrf.mxu0
    %v800 = vadd.f32 0.0, %v799
    %801 = vmatmul.f32.gmra.mxu0 %v762
    %v802 = vpop.f32.mrf.mxu0
    %v803 = vadd.f32 0.0, %v802
    %804 = vmatmul.f32.gmra.mxu0 %v765
    %v805 = vpop.f32.mrf.mxu0
    %v806 = vadd.f32 0.0, %v805
    %807 = vmatmul.f32.gmra.mxu0 %v768
    %v808 = vpop.f32.mrf.mxu0
    %v809 = vadd.f32 0.0, %v808
    %810 = vmatmul.f32.gmra.mxu0 %v771
    %v811 = vpop.f32.mrf.mxu0
    %v812 = vadd.f32 0.0, %v811
    %813 = vmatmul.f32.gmra.mxu0 %v774
    %v814 = vpop.f32.mrf.mxu0
    %v815 = vadd.f32 0.0, %v814
    %816 = vmatmul.f32.gmra.mxu0 %v777
    %v817 = vpop.f32.mrf.mxu0
    %v818 = vadd.f32 0.0, %v817
    %819 = vdwg.mxu0
    %v820 = vsel %vm486, %v607, 0
    %v822 = vsel %vm486, %v610, 0
    %v824 = vsel %vm486, %v613, 0
    %826 = vmatpush.msra.mxu0 0.0
    %827 = vmatpush.msra.mxu0 0.0
    %828 = vmatpush.msra.mxu0 0.0
    %829 = vmatpush.msra.mxu0 0.0
    %830 = vmatpush.msra.mxu0 0.0
    %831 = vmatpush.msra.mxu0 0.0
    %832 = vmatpush.msra.mxu0 0.0
    %833 = vmatpush.msra.mxu0 0.0
    %834 = vmatpush.msra.mxu0 0.0
    %835 = vmatpush.msra.mxu0 0.0
    %836 = vmatpush.msra.mxu0 0.0
    %837 = vmatpush.msra.mxu0 0.0
    %838 = vmatpush.msra.mxu0 %v806
    %839 = vmatpush.msra.mxu0 %v803
    %840 = vmatpush.msra.mxu0 %v800
    %841 = vmatpush.msra.mxu0 %v797
    %842 = vmatmul.f32.gmra.mxu0 %v820
    %v843 = vpop.f32.mrf.mxu0
    %v844 = vadd.f32 0.0, %v843
    %845 = vmatmul.f32.gmra.mxu0 %v822
    %v846 = vpop.f32.mrf.mxu0
    %v847 = vadd.f32 0.0, %v846
    %848 = vmatmul.f32.gmra.mxu0 %v824
    %v849 = vpop.f32.mrf.mxu0
    %v850 = vadd.f32 0.0, %v849
    %851 = vdwg.mxu0
    %v852 = vstv %s709
    %v853 = vmul.f32 %v844, %v852
    %v854 = vmul.f32 %v847, %v852
    %v855 = vmul.f32 %v850, %v852
    %v856 = vmul.f32 %v633, 24.0
    %v857 = vmul.f32 %v636, 24.0
    %v858 = vmul.f32 %v639, 24.0
    %v859 = vadd.f32 %v853, %v856
    %v860 = vadd.f32 %v854, %v857
    %v861 = vadd.f32 %v855, %v858
    %vm862 = vcmask 785920
    %v863 = vsel %vm862, %v607, 0.0
    %v864 = vsel %vm862, %v610, 0.0
    %v865 = vadd.f32 %v863, %v864
    %v866 = vsel %vm862, %v613, 0.0
    %v867 = vadd.f32 %v865, %v866
    %v868 = vrot.slane %v867, 4
    %v869 = vadd.f32 %v867, %v868
    %v870 = vrot.slane %v869, 2
    %v871 = vadd.f32 %v869, %v870
    %v872 = vrot.slane %v871, 1
    %v873 = vadd.f32 %v871, %v872
    %875 = vrot.lane.b32.xlu0 %v873, 64
    %v876 = vpop.permute.xlu0 %875
    %v878 = vmul.f32 %v607, %v876
    %v879 = vmul.f32 %v610, %v876
    %v880 = vmul.f32 %v613, %v876
    %v881 = vsel %vm486, %v878, 0.0
    %882 = vadd.xlane.f32.xlu0 %v881
    %v883 = vpop.xlane.xlu0 %882
    %v884 = vsel %vm486, %v879, 0.0
    %885 = vadd.xlane.f32.xlu0 %v884
    %v886 = vpop.xlane.xlu0 %885
    %v887 = vsel %vm486, %v880, 0.0
    %888 = vadd.xlane.f32.xlu0 %v887
    %v889 = vpop.xlane.xlu0 %888
    %v890 = vmul.f32 %v883, %v852
    %v891 = vmul.f32 %v886, %v852
    %v892 = vmul.f32 %v889, %v852
    %v893 = vadd.f32 %v890, 24.0
    %v894 = vadd.f32 %v891, 24.0
    %v895 = vadd.f32 %v892, 24.0
    %v896 = vrcp.pop %v893
    %v897 = vrcp.pop %v894
    %v898 = vrcp.pop %v895
    %v899 = vmul.f32 %v859, %v896
    %v900 = vmul.f32 %v860, %v897
    %v901 = vmul.f32 %v861, %v898
    %v902 = vadd.f32 %v899, 0.0
    %v903 = vadd.f32 %v900, 0.0
    %v904 = vadd.f32 %v901, 0.0
    %905 = vrot.lane.b32.xlu0 %v607, 96
    %v906 = vpop.permute.xlu0 %905
    %907 = vrot.lane.b32.xlu0 %v610, 96
    %v908 = vpop.permute.xlu0 %907
    %909 = vrot.lane.b32.xlu0 %v613, 96
    %v910 = vpop.permute.xlu0 %909
    %915 = vrot.lane.b32.xlu0 %v809, 96
    %v916 = vpop.permute.xlu0 %915
    %917 = vrot.lane.b32.xlu0 %v812, 96
    %v918 = vpop.permute.xlu0 %917
    %919 = vrot.lane.b32.xlu0 %v815, 96
    %v920 = vpop.permute.xlu0 %919
    %921 = vrot.lane.b32.xlu0 %v818, 96
    %v922 = vpop.permute.xlu0 %921
    %v927 = vsel %vm486, %v906, 0
    %v929 = vsel %vm486, %v908, 0
    %v931 = vsel %vm486, %v910, 0
    %933 = vmatpush.msra.mxu0 0.0
    %934 = vmatpush.msra.mxu0 0.0
    %935 = vmatpush.msra.mxu0 0.0
    %936 = vmatpush.msra.mxu0 0.0
    %937 = vmatpush.msra.mxu0 0.0
    %938 = vmatpush.msra.mxu0 0.0
    %939 = vmatpush.msra.mxu0 0.0
    %940 = vmatpush.msra.mxu0 0.0
    %941 = vmatpush.msra.mxu0 0.0
    %942 = vmatpush.msra.mxu0 0.0
    %943 = vmatpush.msra.mxu0 0.0
    %944 = vmatpush.msra.mxu0 0.0
    %945 = vmatpush.msra.mxu0 %v922
    %946 = vmatpush.msra.mxu0 %v920
    %947 = vmatpush.msra.mxu0 %v918
    %948 = vmatpush.msra.mxu0 %v916
    %949 = vmatmul.f32.gmra.mxu0 %v927
    %v950 = vpop.f32.mrf.mxu0
    %v951 = vadd.f32 0.0, %v950
    %952 = vmatmul.f32.gmra.mxu0 %v929
    %v953 = vpop.f32.mrf.mxu0
    %v954 = vadd.f32 0.0, %v953
    %955 = vmatmul.f32.gmra.mxu0 %v931
    %v956 = vpop.f32.mrf.mxu0
    %v957 = vadd.f32 0.0, %v956
    %958 = vdwg.mxu0
    %v959 = vmul.f32 %v951, %v852
    %v960 = vmul.f32 %v954, %v852
    %v961 = vmul.f32 %v957, %v852
    %965 = vrot.lane.b32.xlu0 %v856, 96
    %v966 = vpop.permute.xlu0 %965
    %967 = vrot.lane.b32.xlu0 %v857, 96
    %v968 = vpop.permute.xlu0 %967
    %969 = vrot.lane.b32.xlu0 %v858, 96
    %v970 = vpop.permute.xlu0 %969
    %v974 = vadd.f32 %v959, %v966
    %v975 = vadd.f32 %v960, %v968
    %v976 = vadd.f32 %v961, %v970
    %vm977 = vcmask 1048320
    %v978 = vsel %vm977, %v607, 0.0
    %v979 = vsel %vm977, %v610, 0.0
    %v980 = vadd.f32 %v978, %v979
    %v981 = vsel %vm977, %v613, 0.0
    %v982 = vadd.f32 %v980, %v981
    %v983 = vrot.slane %v982, 4
    %v984 = vadd.f32 %v982, %v983
    %v985 = vrot.slane %v984, 2
    %v986 = vadd.f32 %v984, %v985
    %v987 = vrot.slane %v986, 1
    %v988 = vadd.f32 %v986, %v987
    %990 = vrot.lane.b32.xlu0 %v988, 64
    %v991 = vpop.permute.xlu0 %990
    %v993 = vmul.f32 %v607, %v991
    %v994 = vmul.f32 %v610, %v991
    %v995 = vmul.f32 %v613, %v991
    %999 = vrot.lane.b32.xlu0 %v993, 96
    %v1000 = vpop.permute.xlu0 %999
    %1001 = vrot.lane.b32.xlu0 %v994, 96
    %v1002 = vpop.permute.xlu0 %1001
    %1003 = vrot.lane.b32.xlu0 %v995, 96
    %v1004 = vpop.permute.xlu0 %1003
    %v1008 = vsel %vm486, %v1000, 0.0
    %1009 = vadd.xlane.f32.xlu0 %v1008
    %v1010 = vpop.xlane.xlu0 %1009
    %v1011 = vsel %vm486, %v1002, 0.0
    %1012 = vadd.xlane.f32.xlu0 %v1011
    %v1013 = vpop.xlane.xlu0 %1012
    %v1014 = vsel %vm486, %v1004, 0.0
    %1015 = vadd.xlane.f32.xlu0 %v1014
    %v1016 = vpop.xlane.xlu0 %1015
    %v1017 = vmul.f32 %v1010, %v852
    %v1018 = vmul.f32 %v1013, %v852
    %v1019 = vmul.f32 %v1016, %v852
    %v1020 = vadd.f32 %v1017, 24.0
    %v1021 = vadd.f32 %v1018, 24.0
    %v1022 = vadd.f32 %v1019, 24.0
    %v1023 = vrcp.pop %v1020
    %v1024 = vrcp.pop %v1021
    %v1025 = vrcp.pop %v1022
    %v1026 = vmul.f32 %v974, %v1023
    %v1027 = vmul.f32 %v975, %v1024
    %v1028 = vmul.f32 %v976, %v1025
    %v1029 = vadd.f32 %v902, %v1026
    %v1030 = vadd.f32 %v903, %v1027
    %v1031 = vadd.f32 %v904, %v1028
    %v1032 = vmul.f32 %v1029, 0.5
    %v1033 = vmul.f32 %v1030, 0.5
    %v1034 = vmul.f32 %v1031, 0.5
    %v1035 = vmul.f32 %v1032, 0.5
    %v1036 = vmul.f32 %v1033, 0.5
    %v1037 = vmul.f32 %v1034, 0.5
    %v1038 = vmul.f32 %v572, 0.5
    %v1039 = vmul.f32 %v573, 0.5
    %v1040 = vmul.f32 %v574, 0.5
    %v1041 = vadd.f32 %v1035, %v1038
    %v1042 = vadd.f32 %v1036, %v1039
    %v1043 = vadd.f32 %v1037, %v1040
    %v1044 = vsel %vm486, %v1041, 0.0
    %1045 = vadd.xlane.f32.xlu0 %v1044
    %v1046 = vpop.xlane.xlu0 %1045
    %v1047 = vsel %vm486, %v1042, 0.0
    %1048 = vadd.xlane.f32.xlu0 %v1047
    %v1049 = vpop.xlane.xlu0 %1048
    %v1050 = vsel %vm486, %v1043, 0.0
    %1051 = vadd.xlane.f32.xlu0 %v1050
    %v1052 = vpop.xlane.xlu0 %1051
    %v1053 = vmul.f32 %v1046, %v502
    %v1054 = vmul.f32 %v1049, %v502
    %v1055 = vmul.f32 %v1052, %v502
    %v1056 = vsub.f32 %v1041, %v1053
    %v1057 = vsub.f32 %v1042, %v1054
    %v1058 = vsub.f32 %v1043, %v1055
    %v1059 = vmul.f32 %v1056, %v1056
    %v1060 = vmul.f32 %v1057, %v1057
    %v1061 = vmul.f32 %v1058, %v1058
    %v1062 = vsel %vm486, %v1059, 0.0
    %1063 = vadd.xlane.f32.xlu0 %v1062
    %v1064 = vpop.xlane.xlu0 %1063
    %v1065 = vsel %vm486, %v1060, 0.0
    %1066 = vadd.xlane.f32.xlu0 %v1065
    %v1067 = vpop.xlane.xlu0 %1066
    %v1068 = vsel %vm486, %v1061, 0.0
    %1069 = vadd.xlane.f32.xlu0 %v1068
    %v1070 = vpop.xlane.xlu0 %1069
    %v1071 = vmul.f32 %v1064, %v502
    %v1072 = vmul.f32 %v1067, %v502
    %v1073 = vmul.f32 %v1070, %v502
    %v1074 = vadd.f32 %v1071, 1e-05
    %v1075 = vadd.f32 %v1072, 1e-05
    %v1076 = vadd.f32 %v1073, 1e-05
    %v1077 = vrsqrt.pop %v1074
    %v1078 = vmul.f32 %v1077, %v1074
    %v1079 = vmul.f32 %v1078, %v1077
    %v1080 = vmul.f32 0.5, %v1079
    %v1081 = vsub.f32 1.5, %v1080
    %v1082 = vmul.f32 %v1077, %v1081
    %vm1083 = vweird.f32 %v1074
    %vm1084 = vweird.f32 %v1077
    %vm1085 = vmor %vm1083, %vm1084
    %v1086 = vsel %vm1085, %v1077, %v1082
    %v1087 = vrsqrt.pop %v1075
    %v1088 = vmul.f32 %v1087, %v1075
    %v1089 = vmul.f32 %v1088, %v1087
    %v1090 = vmul.f32 0.5, %v1089
    %v1091 = vsub.f32 1.5, %v1090
    %v1092 = vmul.f32 %v1087, %v1091
    %vm1093 = vweird.f32 %v1075
    %vm1094 = vweird.f32 %v1087
    %vm1095 = vmor %vm1093, %vm1094
    %v1096 = vsel %vm1095, %v1087, %v1092
    %v1097 = vrsqrt.pop %v1076
    %v1098 = vmul.f32 %v1097, %v1076
    %v1099 = vmul.f32 %v1098, %v1097
    %v1100 = vmul.f32 0.5, %v1099
    %v1101 = vsub.f32 1.5, %v1100
    %v1102 = vmul.f32 %v1097, %v1101
    %vm1103 = vweird.f32 %v1076
    %vm1104 = vweird.f32 %v1097
    %vm1105 = vmor %vm1103, %vm1104
    %v1106 = vsel %vm1105, %v1097, %v1102
    %v1107 = vmul.f32 %v1056, %v1086
    %v1108 = vmul.f32 %v1057, %v1096
    %v1109 = vmul.f32 %v1058, %v1106
    %v1111 = vperm.slane %v400, 0
    %v1113 = vmul.f32 %v1107, %v1111
    %v1114 = vmul.f32 %v1108, %v1111
    %v1115 = vmul.f32 %v1109, %v1111
    %v1117 = vperm.slane %v401, 0
    %v1119 = vadd.f32 %v1113, %v1117
    %v1120 = vadd.f32 %v1114, %v1117
    %v1121 = vadd.f32 %v1115, %v1117
    %v1123 = vperm.slane %v421, 0
    %v1124 = vperm.slane %v421, 1
    %v1128 = vsel %vm486, %v1119, 0
    %v1131 = vsel %vm486, %v1120, 0
    %v1134 = vsel %vm486, %v1121, 0
    %1136 = vmatpush.msra.mxu0 0.0
    %1137 = vmatpush.msra.mxu0 0.0
    %1138 = vmatpush.msra.mxu0 0.0
    %1139 = vmatpush.msra.mxu0 0.0
    %1140 = vmatpush.msra.mxu0 0.0
    %1141 = vmatpush.msra.mxu0 0.0
    %1142 = vmatpush.msra.mxu0 0.0
    %1143 = vmatpush.msra.mxu0 0.0
    %1144 = vmatpush.msra.mxu0 0.0
    %1145 = vmatpush.msra.mxu0 0.0
    %1146 = vmatpush.msra.mxu0 0.0
    %1147 = vmatpush.msra.mxu0 0.0
    %1148 = vmatpush.msra.mxu0 %v419
    %1149 = vmatpush.msra.mxu0 %v417
    %1150 = vmatpush.msra.mxu0 %v415
    %1151 = vmatpush.msra.mxu0 %v413
    %1152 = vmatmul.f32.gmra.mxu0 %v1128
    %v1153 = vpop.f32.mrf.mxu0
    %v1154 = vadd.f32 %v1123, %v1153
    %1155 = vmatmul.f32.gmra.mxu0 %v1131
    %v1156 = vpop.f32.mrf.mxu0
    %v1157 = vadd.f32 %v1123, %v1156
    %1158 = vmatmul.f32.gmra.mxu0 %v1134
    %v1159 = vpop.f32.mrf.mxu0
    %v1160 = vadd.f32 %v1123, %v1159
    %1161 = vdwg.mxu0
    %1162 = vmatpush.msra.mxu0 0.0
    %1163 = vmatpush.msra.mxu0 0.0
    %1164 = vmatpush.msra.mxu0 0.0
    %1165 = vmatpush.msra.mxu0 0.0
    %1166 = vmatpush.msra.mxu0 0.0
    %1167 = vmatpush.msra.mxu0 0.0
    %1168 = vmatpush.msra.mxu0 0.0
    %1169 = vmatpush.msra.mxu0 0.0
    %1170 = vmatpush.msra.mxu0 0.0
    %1171 = vmatpush.msra.mxu0 0.0
    %1172 = vmatpush.msra.mxu0 0.0
    %1173 = vmatpush.msra.mxu0 0.0
    %1174 = vmatpush.msra.mxu0 %v420
    %1175 = vmatpush.msra.mxu0 %v418
    %1176 = vmatpush.msra.mxu0 %v416
    %1177 = vmatpush.msra.mxu0 %v414
    %1178 = vmatmul.f32.gmra.mxu0 %v1128
    %v1179 = vpop.f32.mrf.mxu0
    %v1180 = vadd.f32 %v1124, %v1179
    %1181 = vmatmul.f32.gmra.mxu0 %v1131
    %v1182 = vpop.f32.mrf.mxu0
    %v1183 = vadd.f32 %v1124, %v1182
    %1184 = vmatmul.f32.gmra.mxu0 %v1134
    %v1185 = vpop.f32.mrf.mxu0
    %v1186 = vadd.f32 %v1124, %v1185
    %1187 = vdwg.mxu0
    %v1188 = vmul.f32 %v1154, %v1154
    %v1189 = vmul.f32 %v1157, %v1157
    %v1190 = vmul.f32 %v1160, %v1160
    %v1191 = vsel %vm644, %v1188, 0.0
    %v1192 = vsel %vm644, %v1189, 0.0
    %v1193 = vadd.f32 %v1191, %v1192
    %v1194 = vsel %vm644, %v1190, 0.0
    %v1195 = vadd.f32 %v1193, %v1194
    %1196 = vadd.xlane.f32.xlu0 %v1195
    %v1197 = vpop.xlane.xlu0 %1196
    %v1198 = vrot.slane %v1197, 4
    %v1199 = vadd.f32 %v1197, %v1198
    %v1200 = vrot.slane %v1199, 2
    %v1201 = vadd.f32 %v1199, %v1200
    %v1202 = vrot.slane %v1201, 1
    %v1203 = vadd.f32 %v1201, %v1202
    %s1204 = vtos %v1203
    %v1205 = vstv %s1204
    %v1206 = vrsqrt.pop %v1205
    %v1207 = vmul.f32 %v1206, %v1205
    %v1208 = vmul.f32 %v1207, %v1206
    %v1209 = vmul.f32 0.5, %v1208
    %v1210 = vsub.f32 1.5, %v1209
    %v1211 = vmul.f32 %v1206, %v1210
    %vm1212 = vweird.f32 %v1205
    %vm1213 = vweird.f32 %v1206
    %vm1214 = vmor %vm1212, %vm1213
    %v1215 = vsel %vm1214, %v1206, %v1211
    %s1216 = vtos %v1215
    %1220 = vrot.lane.b32.xlu0 %v1188, 64
    %v1221 = vpop.permute.xlu0 %1220
    %1222 = vrot.lane.b32.xlu0 %v1189, 64
    %v1223 = vpop.permute.xlu0 %1222
    %1224 = vrot.lane.b32.xlu0 %v1190, 64
    %v1225 = vpop.permute.xlu0 %1224
    %v1229 = vsel %vm644, %v1221, 0.0
    %v1230 = vsel %vm644, %v1223, 0.0
    %v1231 = vadd.f32 %v1229, %v1230
    %v1232 = vsel %vm644, %v1225, 0.0
    %v1233 = vadd.f32 %v1231, %v1232
    %1234 = vadd.xlane.f32.xlu0 %v1233
    %v1235 = vpop.xlane.xlu0 %1234
    %v1236 = vrot.slane %v1235, 4
    %v1237 = vadd.f32 %v1235, %v1236
    %v1238 = vrot.slane %v1237, 2
    %v1239 = vadd.f32 %v1237, %v1238
    %v1240 = vrot.slane %v1239, 1
    %v1241 = vadd.f32 %v1239, %v1240
    %s1242 = vtos %v1241
    %v1243 = vstv %s1242
    %v1244 = vrsqrt.pop %v1243
    %v1245 = vmul.f32 %v1244, %v1243
    %v1246 = vmul.f32 %v1245, %v1244
    %v1247 = vmul.f32 0.5, %v1246
    %v1248 = vsub.f32 1.5, %v1247
    %v1249 = vmul.f32 %v1244, %v1248
    %vm1250 = vweird.f32 %v1243
    %vm1251 = vweird.f32 %v1244
    %vm1252 = vmor %vm1250, %vm1251
    %v1253 = vsel %vm1252, %v1244, %v1249
    %s1254 = vtos %v1253
    %s1255 = smul.f32 %s1216, %s1254
    %1259 = vrot.lane.b32.xlu0 %v1154, 64
    %v1260 = vpop.permute.xlu0 %1259
    %1261 = vrot.lane.b32.xlu0 %v1157, 64
    %v1262 = vpop.permute.xlu0 %1261
    %1263 = vrot.lane.b32.xlu0 %v1160, 64
    %v1264 = vpop.permute.xlu0 %1263
    %1268 = vxpose.xlu0.b32.start [1/16] %v1260, 128
    %1269 = vxpose.xlu0.b32.cont [2/16] %v1262, 128
    %1270 = vxpose.xlu0.b32.cont [3/16] %v1264, 128
    %1271 = vxpose.xlu0.b32.cont [4/16] 0.0, 128
    %1272 = vxpose.xlu0.b32.cont [5/16] 0.0, 128
    %1273 = vxpose.xlu0.b32.cont [6/16] 0.0, 128
    %1274 = vxpose.xlu0.b32.cont [7/16] 0.0, 128
    %1275 = vxpose.xlu0.b32.cont [8/16] 0.0, 128
    %1276 = vxpose.xlu0.b32.cont [9/16] 0.0, 128
    %1277 = vxpose.xlu0.b32.cont [10/16] 0.0, 128
    %1278 = vxpose.xlu0.b32.cont [11/16] 0.0, 128
    %1279 = vxpose.xlu0.b32.cont [12/16] 0.0, 128
    %1280 = vxpose.xlu0.b32.cont [13/16] 0.0, 128
    %1281 = vxpose.xlu0.b32.cont [14/16] 0.0, 128
    %1282 = vxpose.xlu0.b32.cont [15/16] 0.0, 128
    %1283 = vxpose.xlu0.b32.end [16/16] 0.0, 128
    %v1284 = vpop.trf.xlu0
    %v1285 = vpop.trf.xlu0
    %v1286 = vpop.trf.xlu0
    %v1287 = vpop.trf.xlu0
    %v1288 = vpop.trf.xlu0
    %v1289 = vpop.trf.xlu0
    %v1290 = vpop.trf.xlu0
    %v1291 = vpop.trf.xlu0
    %v1292 = vpop.trf.xlu0
    %v1293 = vpop.trf.xlu0
    %v1294 = vpop.trf.xlu0
    %v1295 = vpop.trf.xlu0
    %v1296 = vpop.trf.xlu0
    %v1297 = vpop.trf.xlu0
    %v1298 = vpop.trf.xlu0
    %v1299 = vpop.trf.xlu0
    %v1301 = vsel %vm754, %v1284, 0
    %v1304 = vsel %vm754, %v1285, 0
    %v1307 = vsel %vm754, %v1286, 0
    %v1310 = vsel %vm754, %v1287, 0
    %v1313 = vsel %vm754, %v1288, 0
    %v1316 = vsel %vm754, %v1289, 0
    %v1319 = vsel %vm754, %v1290, 0
    %v1322 = vsel %vm754, %v1291, 0
    %1324 = vmatpush.msra.mxu0 0.0
    %1325 = vmatpush.msra.mxu0 0.0
    %1326 = vmatpush.msra.mxu0 0.0
    %1327 = vmatpush.msra.mxu0 0.0
    %1328 = vmatpush.msra.mxu0 0.0
    %1329 = vmatpush.msra.mxu0 0.0
    %1330 = vmatpush.msra.mxu0 0.0
    %1331 = vmatpush.msra.mxu0 0.0
    %1332 = vmatpush.msra.mxu0 0.0
    %1333 = vmatpush.msra.mxu0 0.0
    %1334 = vmatpush.msra.mxu0 0.0
    %1335 = vmatpush.msra.mxu0 0.0
    %1336 = vmatpush.msra.mxu0 0.0
    %1337 = vmatpush.msra.mxu0 %v1186
    %1338 = vmatpush.msra.mxu0 %v1183
    %1339 = vmatpush.msra.mxu0 %v1180
    %1340 = vmatmul.f32.gmra.mxu0 %v1301
    %v1341 = vpop.f32.mrf.mxu0
    %v1342 = vadd.f32 0.0, %v1341
    %1343 = vmatmul.f32.gmra.mxu0 %v1304
    %v1344 = vpop.f32.mrf.mxu0
    %v1345 = vadd.f32 0.0, %v1344
    %1346 = vmatmul.f32.gmra.mxu0 %v1307
    %v1347 = vpop.f32.mrf.mxu0
    %v1348 = vadd.f32 0.0, %v1347
    %1349 = vmatmul.f32.gmra.mxu0 %v1310
    %v1350 = vpop.f32.mrf.mxu0
    %v1351 = vadd.f32 0.0, %v1350
    %1352 = vmatmul.f32.gmra.mxu0 %v1313
    %v1353 = vpop.f32.mrf.mxu0
    %v1354 = vadd.f32 0.0, %v1353
    %1355 = vmatmul.f32.gmra.mxu0 %v1316
    %v1356 = vpop.f32.mrf.mxu0
    %v1357 = vadd.f32 0.0, %v1356
    %1358 = vmatmul.f32.gmra.mxu0 %v1319
    %v1359 = vpop.f32.mrf.mxu0
    %v1360 = vadd.f32 0.0, %v1359
    %1361 = vmatmul.f32.gmra.mxu0 %v1322
    %v1362 = vpop.f32.mrf.mxu0
    %v1363 = vadd.f32 0.0, %v1362
    %1364 = vdwg.mxu0
    %v1365 = vsel %vm486, %v1154, 0
    %v1367 = vsel %vm486, %v1157, 0
    %v1369 = vsel %vm486, %v1160, 0
    %1371 = vmatpush.msra.mxu0 0.0
    %1372 = vmatpush.msra.mxu0 0.0
    %1373 = vmatpush.msra.mxu0 0.0
    %1374 = vmatpush.msra.mxu0 0.0
    %1375 = vmatpush.msra.mxu0 0.0
    %1376 = vmatpush.msra.mxu0 0.0
    %1377 = vmatpush.msra.mxu0 0.0
    %1378 = vmatpush.msra.mxu0 0.0
    %1379 = vmatpush.msra.mxu0 0.0
    %1380 = vmatpush.msra.mxu0 0.0
    %1381 = vmatpush.msra.mxu0 0.0
    %1382 = vmatpush.msra.mxu0 0.0
    %1383 = vmatpush.msra.mxu0 %v1351
    %1384 = vmatpush.msra.mxu0 %v1348
    %1385 = vmatpush.msra.mxu0 %v1345
    %1386 = vmatpush.msra.mxu0 %v1342
    %1387 = vmatmul.f32.gmra.mxu0 %v1365
    %v1388 = vpop.f32.mrf.mxu0
    %v1389 = vadd.f32 0.0, %v1388
    %1390 = vmatmul.f32.gmra.mxu0 %v1367
    %v1391 = vpop.f32.mrf.mxu0
    %v1392 = vadd.f32 0.0, %v1391
    %1393 = vmatmul.f32.gmra.mxu0 %v1369
    %v1394 = vpop.f32.mrf.mxu0
    %v1395 = vadd.f32 0.0, %v1394
    %1396 = vdwg.mxu0
    %v1397 = vstv %s1255
    %v1398 = vmul.f32 %v1389, %v1397
    %v1399 = vmul.f32 %v1392, %v1397
    %v1400 = vmul.f32 %v1395, %v1397
    %v1401 = vmul.f32 %v1180, 24.0
    %v1402 = vmul.f32 %v1183, 24.0
    %v1403 = vmul.f32 %v1186, 24.0
    %v1404 = vadd.f32 %v1398, %v1401
    %v1405 = vadd.f32 %v1399, %v1402
    %v1406 = vadd.f32 %v1400, %v1403
    %v1407 = vsel %vm862, %v1154, 0.0
    %v1408 = vsel %vm862, %v1157, 0.0
    %v1409 = vadd.f32 %v1407, %v1408
    %v1410 = vsel %vm862, %v1160, 0.0
    %v1411 = vadd.f32 %v1409, %v1410
    %v1412 = vrot.slane %v1411, 4
    %v1413 = vadd.f32 %v1411, %v1412
    %v1414 = vrot.slane %v1413, 2
    %v1415 = vadd.f32 %v1413, %v1414
    %v1416 = vrot.slane %v1415, 1
    %v1417 = vadd.f32 %v1415, %v1416
    %1419 = vrot.lane.b32.xlu0 %v1417, 64
    %v1420 = vpop.permute.xlu0 %1419
    %v1422 = vmul.f32 %v1154, %v1420
    %v1423 = vmul.f32 %v1157, %v1420
    %v1424 = vmul.f32 %v1160, %v1420
    %v1425 = vsel %vm486, %v1422, 0.0
    %1426 = vadd.xlane.f32.xlu0 %v1425
    %v1427 = vpop.xlane.xlu0 %1426
    %v1428 = vsel %vm486, %v1423, 0.0
    %1429 = vadd.xlane.f32.xlu0 %v1428
    %v1430 = vpop.xlane.xlu0 %1429
    %v1431 = vsel %vm486, %v1424, 0.0
    %1432 = vadd.xlane.f32.xlu0 %v1431
    %v1433 = vpop.xlane.xlu0 %1432
    %v1434 = vmul.f32 %v1427, %v1397
    %v1435 = vmul.f32 %v1430, %v1397
    %v1436 = vmul.f32 %v1433, %v1397
    %v1437 = vadd.f32 %v1434, 24.0
    %v1438 = vadd.f32 %v1435, 24.0
    %v1439 = vadd.f32 %v1436, 24.0
    %v1440 = vrcp.pop %v1437
    %v1441 = vrcp.pop %v1438
    %v1442 = vrcp.pop %v1439
    %v1443 = vmul.f32 %v1404, %v1440
    %v1444 = vmul.f32 %v1405, %v1441
    %v1445 = vmul.f32 %v1406, %v1442
    %v1446 = vadd.f32 %v1443, 0.0
    %v1447 = vadd.f32 %v1444, 0.0
    %v1448 = vadd.f32 %v1445, 0.0
    %1449 = vrot.lane.b32.xlu0 %v1154, 96
    %v1450 = vpop.permute.xlu0 %1449
    %1451 = vrot.lane.b32.xlu0 %v1157, 96
    %v1452 = vpop.permute.xlu0 %1451
    %1453 = vrot.lane.b32.xlu0 %v1160, 96
    %v1454 = vpop.permute.xlu0 %1453
    %1459 = vrot.lane.b32.xlu0 %v1354, 96
    %v1460 = vpop.permute.xlu0 %1459
    %1461 = vrot.lane.b32.xlu0 %v1357, 96
    %v1462 = vpop.permute.xlu0 %1461
    %1463 = vrot.lane.b32.xlu0 %v1360, 96
    %v1464 = vpop.permute.xlu0 %1463
    %1465 = vrot.lane.b32.xlu0 %v1363, 96
    %v1466 = vpop.permute.xlu0 %1465
    %v1471 = vsel %vm486, %v1450, 0
    %v1473 = vsel %vm486, %v1452, 0
    %v1475 = vsel %vm486, %v1454, 0
    %1477 = vmatpush.msra.mxu0 0.0
    %1478 = vmatpush.msra.mxu0 0.0
    %1479 = vmatpush.msra.mxu0 0.0
    %1480 = vmatpush.msra.mxu0 0.0
    %1481 = vmatpush.msra.mxu0 0.0
    %1482 = vmatpush.msra.mxu0 0.0
    %1483 = vmatpush.msra.mxu0 0.0
    %1484 = vmatpush.msra.mxu0 0.0
    %1485 = vmatpush.msra.mxu0 0.0
    %1486 = vmatpush.msra.mxu0 0.0
    %1487 = vmatpush.msra.mxu0 0.0
    %1488 = vmatpush.msra.mxu0 0.0
    %1489 = vmatpush.msra.mxu0 %v1466
    %1490 = vmatpush.msra.mxu0 %v1464
    %1491 = vmatpush.msra.mxu0 %v1462
    %1492 = vmatpush.msra.mxu0 %v1460
    %1493 = vmatmul.f32.gmra.mxu0 %v1471
    %v1494 = vpop.f32.mrf.mxu0
    %v1495 = vadd.f32 0.0, %v1494
    %1496 = vmatmul.f32.gmra.mxu0 %v1473
    %v1497 = vpop.f32.mrf.mxu0
    %v1498 = vadd.f32 0.0, %v1497
    %1499 = vmatmul.f32.gmra.mxu0 %v1475
    %v1500 = vpop.f32.mrf.mxu0
    %v1501 = vadd.f32 0.0, %v1500
    %1502 = vdwg.mxu0
    %v1503 = vmul.f32 %v1495, %v1397
    %v1504 = vmul.f32 %v1498, %v1397
    %v1505 = vmul.f32 %v1501, %v1397
    %1509 = vrot.lane.b32.xlu0 %v1401, 96
    %v1510 = vpop.permute.xlu0 %1509
    %1511 = vrot.lane.b32.xlu0 %v1402, 96
    %v1512 = vpop.permute.xlu0 %1511
    %1513 = vrot.lane.b32.xlu0 %v1403, 96
    %v1514 = vpop.permute.xlu0 %1513
    %v1518 = vadd.f32 %v1503, %v1510
    %v1519 = vadd.f32 %v1504, %v1512
    %v1520 = vadd.f32 %v1505, %v1514
    %v1521 = vsel %vm977, %v1154, 0.0
    %v1522 = vsel %vm977, %v1157, 0.0
    %v1523 = vadd.f32 %v1521, %v1522
    %v1524 = vsel %vm977, %v1160, 0.0
    %v1525 = vadd.f32 %v1523, %v1524
    %v1526 = vrot.slane %v1525, 4
    %v1527 = vadd.f32 %v1525, %v1526
    %v1528 = vrot.slane %v1527, 2
    %v1529 = vadd.f32 %v1527, %v1528
    %v1530 = vrot.slane %v1529, 1
    %v1531 = vadd.f32 %v1529, %v1530
    %1533 = vrot.lane.b32.xlu0 %v1531, 64
    %v1534 = vpop.permute.xlu0 %1533
    %v1536 = vmul.f32 %v1154, %v1534
    %v1537 = vmul.f32 %v1157, %v1534
    %v1538 = vmul.f32 %v1160, %v1534
    %1542 = vrot.lane.b32.xlu0 %v1536, 96
    %v1543 = vpop.permute.xlu0 %1542
    %1544 = vrot.lane.b32.xlu0 %v1537, 96
    %v1545 = vpop.permute.xlu0 %1544
    %1546 = vrot.lane.b32.xlu0 %v1538, 96
    %v1547 = vpop.permute.xlu0 %1546
    %v1551 = vsel %vm486, %v1543, 0.0
    %1552 = vadd.xlane.f32.xlu0 %v1551
    %v1553 = vpop.xlane.xlu0 %1552
    %v1554 = vsel %vm486, %v1545, 0.0
    %1555 = vadd.xlane.f32.xlu0 %v1554
    %v1556 = vpop.xlane.xlu0 %1555
    %v1557 = vsel %vm486, %v1547, 0.0
    %1558 = vadd.xlane.f32.xlu0 %v1557
    %v1559 = vpop.xlane.xlu0 %1558
    %v1560 = vmul.f32 %v1553, %v1397
    %v1561 = vmul.f32 %v1556, %v1397
    %v1562 = vmul.f32 %v1559, %v1397
    %v1563 = vadd.f32 %v1560, 24.0
    %v1564 = vadd.f32 %v1561, 24.0
    %v1565 = vadd.f32 %v1562, 24.0
    %v1566 = vrcp.pop %v1563
    %v1567 = vrcp.pop %v1564
    %v1568 = vrcp.pop %v1565
    %v1569 = vmul.f32 %v1518, %v1566
    %v1570 = vmul.f32 %v1519, %v1567
    %v1571 = vmul.f32 %v1520, %v1568
    %v1572 = vadd.f32 %v1446, %v1569
    %v1573 = vadd.f32 %v1447, %v1570
    %v1574 = vadd.f32 %v1448, %v1571
    %v1575 = vmul.f32 %v1572, 0.5
    %v1576 = vmul.f32 %v1573, 0.5
    %v1577 = vmul.f32 %v1574, 0.5
    %v1578 = vmul.f32 %v1575, 0.5
    %v1579 = vmul.f32 %v1576, 0.5
    %v1580 = vmul.f32 %v1577, 0.5
    %v1581 = vmul.f32 %v1119, 0.5
    %v1582 = vmul.f32 %v1120, 0.5
    %v1583 = vmul.f32 %v1121, 0.5
    %v1584 = vadd.f32 %v1578, %v1581
    %v1585 = vadd.f32 %v1579, %v1582
    %v1586 = vadd.f32 %v1580, %v1583
    %v1587 = vsel %vm486, %v1584, 0.0
    %1588 = vadd.xlane.f32.xlu0 %v1587
    %v1589 = vpop.xlane.xlu0 %1588
    %v1590 = vsel %vm486, %v1585, 0.0
    %1591 = vadd.xlane.f32.xlu0 %v1590
    %v1592 = vpop.xlane.xlu0 %1591
    %v1593 = vsel %vm486, %v1586, 0.0
    %1594 = vadd.xlane.f32.xlu0 %v1593
    %v1595 = vpop.xlane.xlu0 %1594
    %v1596 = vmul.f32 %v1589, %v502
    %v1597 = vmul.f32 %v1592, %v502
    %v1598 = vmul.f32 %v1595, %v502
    %v1599 = vsub.f32 %v1584, %v1596
    %v1600 = vsub.f32 %v1585, %v1597
    %v1601 = vsub.f32 %v1586, %v1598
    %v1602 = vmul.f32 %v1599, %v1599
    %v1603 = vmul.f32 %v1600, %v1600
    %v1604 = vmul.f32 %v1601, %v1601
    %v1605 = vsel %vm486, %v1602, 0.0
    %1606 = vadd.xlane.f32.xlu0 %v1605
    %v1607 = vpop.xlane.xlu0 %1606
    %v1608 = vsel %vm486, %v1603, 0.0
    %1609 = vadd.xlane.f32.xlu0 %v1608
    %v1610 = vpop.xlane.xlu0 %1609
    %v1611 = vsel %vm486, %v1604, 0.0
    %1612 = vadd.xlane.f32.xlu0 %v1611
    %v1613 = vpop.xlane.xlu0 %1612
    %v1614 = vmul.f32 %v1607, %v502
    %v1615 = vmul.f32 %v1610, %v502
    %v1616 = vmul.f32 %v1613, %v502
    %v1617 = vadd.f32 %v1614, 1e-05
    %v1618 = vadd.f32 %v1615, 1e-05
    %v1619 = vadd.f32 %v1616, 1e-05
    %v1620 = vrsqrt.pop %v1617
    %v1621 = vmul.f32 %v1620, %v1617
    %v1622 = vmul.f32 %v1621, %v1620
    %v1623 = vmul.f32 0.5, %v1622
    %v1624 = vsub.f32 1.5, %v1623
    %v1625 = vmul.f32 %v1620, %v1624
    %vm1626 = vweird.f32 %v1617
    %vm1627 = vweird.f32 %v1620
    %vm1628 = vmor %vm1626, %vm1627
    %v1629 = vsel %vm1628, %v1620, %v1625
    %v1630 = vrsqrt.pop %v1618
    %v1631 = vmul.f32 %v1630, %v1618
    %v1632 = vmul.f32 %v1631, %v1630
    %v1633 = vmul.f32 0.5, %v1632
    %v1634 = vsub.f32 1.5, %v1633
    %v1635 = vmul.f32 %v1630, %v1634
    %vm1636 = vweird.f32 %v1618
    %vm1637 = vweird.f32 %v1630
    %vm1638 = vmor %vm1636, %vm1637
    %v1639 = vsel %vm1638, %v1630, %v1635
    %v1640 = vrsqrt.pop %v1619
    %v1641 = vmul.f32 %v1640, %v1619
    %v1642 = vmul.f32 %v1641, %v1640
    %v1643 = vmul.f32 0.5, %v1642
    %v1644 = vsub.f32 1.5, %v1643
    %v1645 = vmul.f32 %v1640, %v1644
    %vm1646 = vweird.f32 %v1619
    %vm1647 = vweird.f32 %v1640
    %vm1648 = vmor %vm1646, %vm1647
    %v1649 = vsel %vm1648, %v1640, %v1645
    %v1650 = vmul.f32 %v1599, %v1629
    %v1651 = vmul.f32 %v1600, %v1639
    %v1652 = vmul.f32 %v1601, %v1649
    %v1654 = vperm.slane %v402, 0
    %v1656 = vmul.f32 %v1650, %v1654
    %v1657 = vmul.f32 %v1651, %v1654
    %v1658 = vmul.f32 %v1652, %v1654
    %v1660 = vperm.slane %v403, 0
    %v1662 = vadd.f32 %v1656, %v1660
    %v1663 = vadd.f32 %v1657, %v1660
    %v1664 = vadd.f32 %v1658, %v1660
    %1665 = vmatpush.msra.mxu0 0.0
    %1666 = vmatpush.msra.mxu0 0.0
    %1667 = vmatpush.msra.mxu0 0.0
    %1668 = vmatpush.msra.mxu0 0.0
    %1669 = vmatpush.msra.mxu0 0.0
    %1670 = vmatpush.msra.mxu0 0.0
    %1671 = vmatpush.msra.mxu0 0.0
    %1672 = vmatpush.msra.mxu0 0.0
    %1673 = vmatpush.msra.mxu0 0.0
    %1674 = vmatpush.msra.mxu0 0.0
    %1675 = vmatpush.msra.mxu0 0.0
    %1676 = vmatpush.msra.mxu0 0.0
    %1677 = vmatpush.msra.mxu0 0.0
    %1678 = vmatpush.msra.mxu0 0.0
    %1679 = vmatpush.msra.mxu0 %v423
    %1680 = vmatpush.msra.mxu0 %v422
    %1681 = vmatmul.f32.gmra.mxu0 %v452
    %v1682 = vpop.f32.mrf.mxu0
    %v1683 = vadd.f32 0.0, %v1682
    %1684 = vmatmul.f32.gmra.mxu0 %v455
    %v1685 = vpop.f32.mrf.mxu0
    %v1686 = vadd.f32 0.0, %v1685
    %1687 = vmatmul.f32.gmra.mxu0 %v458
    %v1688 = vpop.f32.mrf.mxu0
    %v1689 = vadd.f32 0.0, %v1688
    %1690 = vdwg.mxu0
    %v1692 = vperm.slane %v424, 0
    %v1695 = vsel %vm754, %v444, 0
    %v1698 = vsel %vm754, %v445, 0
    %v1701 = vsel %vm754, %v446, 0
    %1703 = vmatpush.msra.mxu0 0.0
    %1704 = vmatpush.msra.mxu0 0.0
    %1705 = vmatpush.msra.mxu0 0.0
    %1706 = vmatpush.msra.mxu0 0.0
    %1707 = vmatpush.msra.mxu0 0.0
    %1708 = vmatpush.msra.mxu0 0.0
    %1709 = vmatpush.msra.mxu0 0.0
    %1710 = vmatpush.msra.mxu0 0.0
    %1711 = vmatpush.msra.mxu0 0.0
    %1712 = vmatpush.msra.mxu0 0.0
    %1713 = vmatpush.msra.mxu0 0.0
    %1714 = vmatpush.msra.mxu0 0.0
    %1715 = vmatpush.msra.mxu0 0.0
    %1716 = vmatpush.msra.mxu0 %v1689
    %1717 = vmatpush.msra.mxu0 %v1686
    %1718 = vmatpush.msra.mxu0 %v1683
    %1719 = vmatmul.f32.gmra.mxu0 %v1695
    %v1720 = vpop.f32.mrf.mxu0
    %v1721 = vadd.f32 %v1692, %v1720
    %1722 = vmatmul.f32.gmra.mxu0 %v1698
    %v1723 = vpop.f32.mrf.mxu0
    %v1724 = vadd.f32 %v1692, %v1723
    %1725 = vmatmul.f32.gmra.mxu0 %v1701
    %v1726 = vpop.f32.mrf.mxu0
    %v1727 = vadd.f32 %v1692, %v1726
    %1728 = vdwg.mxu0
    %v1729 = vsel %vm486, %v1721, 0.0
    %v1730 = vsel %vm486, %v1724, 0.0
    %v1731 = vadd.f32 %v1729, %v1730
    %v1732 = vsel %vm486, %v1727, 0.0
    %v1733 = vadd.f32 %v1731, %v1732
    %v1734 = vrot.slane %v1733, 4
    %v1735 = vadd.f32 %v1733, %v1734
    %v1736 = vrot.slane %v1735, 2
    %v1737 = vadd.f32 %v1735, %v1736
    %v1738 = vrot.slane %v1737, 1
    %v1739 = vadd.f32 %v1737, %v1738
    %v1740 = vrcp.pop 24.0
    %v1741 = vmul.f32 24.0, %v1740
    %v1742 = vsub.f32 1.0, %v1741
    %v1743 = vmul.f32 %v1740, %v1742
    %v1744 = vadd.f32 %v1740, %v1743
    %vm1745 = vweird.f32 %v1740
    %v1746 = vsel %vm1745, %v1740, %v1744
    %v1747 = vmul.f32 %v1739, %v1746
    %v1748 = vsub.f32 %v1721, %v1747
    %v1749 = vsub.f32 %v1724, %v1747
    %v1750 = vsub.f32 %v1727, %v1747
    %v1751 = vmul.f32 %v1748, %v1748
    %v1752 = vmul.f32 %v1749, %v1749
    %v1753 = vmul.f32 %v1750, %v1750
    %v1754 = vsel %vm486, %v1751, 0.0
    %v1755 = vsel %vm486, %v1752, 0.0
    %v1756 = vadd.f32 %v1754, %v1755
    %v1757 = vsel %vm486, %v1753, 0.0
    %v1758 = vadd.f32 %v1756, %v1757
    %v1759 = vrot.slane %v1758, 4
    %v1760 = vadd.f32 %v1758, %v1759
    %v1761 = vrot.slane %v1760, 2
    %v1762 = vadd.f32 %v1760, %v1761
    %v1763 = vrot.slane %v1762, 1
    %v1764 = vadd.f32 %v1762, %v1763
    %v1765 = vmul.f32 %v1764, %v1746
    %v1766 = vadd.f32 %v1765, 1e-05
    %v1767 = vrsqrt.pop %v1766
    %v1768 = vmul.f32 %v1767, %v1766
    %v1769 = vmul.f32 %v1768, %v1767
    %v1770 = vmul.f32 0.5, %v1769
    %v1771 = vsub.f32 1.5, %v1770
    %v1772 = vmul.f32 %v1767, %v1771
    %vm1773 = vweird.f32 %v1766
    %vm1774 = vweird.f32 %v1767
    %vm1775 = vmor %vm1773, %vm1774
    %v1776 = vsel %vm1775, %v1767, %v1772
    %v1777 = vmul.f32 %v1748, %v1776
    %v1778 = vmul.f32 %v1749, %v1776
    %v1779 = vmul.f32 %v1750, %v1776
    %v1781 = vperm.slane %v430, 0
    %v1783 = vmul.f32 %v1777, %v1781
    %v1784 = vmul.f32 %v1778, %v1781
    %v1785 = vmul.f32 %v1779, %v1781
    %v1787 = vperm.slane %v431, 0
    %v1789 = vadd.f32 %v1783, %v1787
    %v1790 = vadd.f32 %v1784, %v1787
    %v1791 = vadd.f32 %v1785, %v1787
    %v1792 = vmax.f32 %v1789, 0.0
    %v1793 = vmax.f32 %v1790, 0.0
    %v1794 = vmax.f32 %v1791, 0.0
    %v1796 = vsel %vm486, %v1792, 0
    %v1799 = vsel %vm486, %v1793, 0
    %v1802 = vsel %vm486, %v1794, 0
    %1804 = vmatpush.msra.mxu0 0.0
    %1805 = vmatpush.msra.mxu0 0.0
    %1806 = vmatpush.msra.mxu0 0.0
    %1807 = vmatpush.msra.mxu0 0.0
    %1808 = vmatpush.msra.mxu0 0.0
    %1809 = vmatpush.msra.mxu0 0.0
    %1810 = vmatpush.msra.mxu0 0.0
    %1811 = vmatpush.msra.mxu0 0.0
    %1812 = vmatpush.msra.mxu0 0.0
    %1813 = vmatpush.msra.mxu0 0.0
    %1814 = vmatpush.msra.mxu0 0.0
    %1815 = vmatpush.msra.mxu0 0.0
    %1816 = vmatpush.msra.mxu0 %v428
    %1817 = vmatpush.msra.mxu0 %v427
    %1818 = vmatpush.msra.mxu0 %v426
    %1819 = vmatpush.msra.mxu0 %v425
    %1820 = vmatmul.f32.gmra.mxu0 %v1796
    %v1821 = vpop.f32.mrf.mxu0
    %v1822 = vadd.f32 0.0, %v1821
    %1823 = vmatmul.f32.gmra.mxu0 %v1799
    %v1824 = vpop.f32.mrf.mxu0
    %v1825 = vadd.f32 0.0, %v1824
    %1826 = vmatmul.f32.gmra.mxu0 %v1802
    %v1827 = vpop.f32.mrf.mxu0
    %v1828 = vadd.f32 0.0, %v1827
    %1829 = vdwg.mxu0
    %v1831 = vperm.slane %v429, 0
    %1833 = vmatpush.msra.mxu0 0.0
    %1834 = vmatpush.msra.mxu0 0.0
    %1835 = vmatpush.msra.mxu0 0.0
    %1836 = vmatpush.msra.mxu0 0.0
    %1837 = vmatpush.msra.mxu0 0.0
    %1838 = vmatpush.msra.mxu0 0.0
    %1839 = vmatpush.msra.mxu0 0.0
    %1840 = vmatpush.msra.mxu0 0.0
    %1841 = vmatpush.msra.mxu0 0.0
    %1842 = vmatpush.msra.mxu0 0.0
    %1843 = vmatpush.msra.mxu0 0.0
    %1844 = vmatpush.msra.mxu0 0.0
    %1845 = vmatpush.msra.mxu0 0.0
    %1846 = vmatpush.msra.mxu0 %v1828
    %1847 = vmatpush.msra.mxu0 %v1825
    %1848 = vmatpush.msra.mxu0 %v1822
    %1849 = vmatmul.f32.gmra.mxu0 %v1695
    %v1850 = vpop.f32.mrf.mxu0
    %v1851 = vadd.f32 %v1831, %v1850
    %1852 = vmatmul.f32.gmra.mxu0 %v1698
    %v1853 = vpop.f32.mrf.mxu0
    %v1854 = vadd.f32 %v1831, %v1853
    %1855 = vmatmul.f32.gmra.mxu0 %v1701
    %v1856 = vpop.f32.mrf.mxu0
    %v1857 = vadd.f32 %v1831, %v1856
    %1858 = vdwg.mxu0
    %v1859 = vmul.f32 %v1851, 0.8
    %v1860 = vmul.f32 %v1854, 0.8
    %v1861 = vmul.f32 %v1857, 0.8
    %v1862 = vmul.f32 %v1662, 0.2
    %v1863 = vmul.f32 %v1663, 0.2
    %v1864 = vmul.f32 %v1664, 0.2
    %v1865 = vadd.f32 %v1859, %v1862
    %v1866 = vadd.f32 %v1860, %v1863
    %v1867 = vadd.f32 %v1861, %v1864
    %v1868 = vld [vmem:[#allocation6] sm:$0xf]
    %v1870 = vsel %vm754, %v1868, 0
    %1872 = vmatpush.msra.mxu0 0.0
    %1873 = vmatpush.msra.mxu0 0.0
    %1874 = vmatpush.msra.mxu0 0.0
    %1875 = vmatpush.msra.mxu0 0.0
    %1876 = vmatpush.msra.mxu0 0.0
    %1877 = vmatpush.msra.mxu0 0.0
    %1878 = vmatpush.msra.mxu0 0.0
    %1879 = vmatpush.msra.mxu0 0.0
    %1880 = vmatpush.msra.mxu0 0.0
    %1881 = vmatpush.msra.mxu0 0.0
    %1882 = vmatpush.msra.mxu0 0.0
    %1883 = vmatpush.msra.mxu0 0.0
    %1884 = vmatpush.msra.mxu0 0.0
    %1885 = vmatpush.msra.mxu0 %v1867
    %1886 = vmatpush.msra.mxu0 %v1866
    %1887 = vmatpush.msra.mxu0 %v1865
    %1888 = vmatmul.f32.gmra.mxu0 %v1870
    %v1889 = vpop.f32.mrf.mxu0
    %v1890 = vadd.f32 0.0, %v1889
    %1891 = vdwg.mxu0
    %v1893 = vperm.slane %v436, 0
    %v1896 = vsel %vm486, %v1890, 0
    %1898 = vmatpush.msra.mxu0 0.0
    %1899 = vmatpush.msra.mxu0 0.0
    %1900 = vmatpush.msra.mxu0 0.0
    %1901 = vmatpush.msra.mxu0 0.0
    %1902 = vmatpush.msra.mxu0 0.0
    %1903 = vmatpush.msra.mxu0 0.0
    %1904 = vmatpush.msra.mxu0 0.0
    %1905 = vmatpush.msra.mxu0 0.0
    %1906 = vmatpush.msra.mxu0 0.0
    %1907 = vmatpush.msra.mxu0 0.0
    %1908 = vmatpush.msra.mxu0 0.0
    %1909 = vmatpush.msra.mxu0 0.0
    %1910 = vmatpush.msra.mxu0 %v435
    %1911 = vmatpush.msra.mxu0 %v434
    %1912 = vmatpush.msra.mxu0 %v433
    %1913 = vmatpush.msra.mxu0 %v432
    %1914 = vmatmul.f32.gmra.mxu0 %v1896
    %v1915 = vpop.f32.mrf.mxu0
    %v1916 = vadd.f32 %v1893, %v1915
    %1917 = vdwg.mxu0
    %v1918 = vld [vmem:[#allocation8] sm:$0xf]
    %v1920 = vsel %vm486, %v1918, 0
    %1922 = vmatpush.msra.mxu0 0.0
    %1923 = vmatpush.msra.mxu0 0.0
    %1924 = vmatpush.msra.mxu0 0.0
    %1925 = vmatpush.msra.mxu0 0.0
    %1926 = vmatpush.msra.mxu0 0.0
    %1927 = vmatpush.msra.mxu0 0.0
    %1928 = vmatpush.msra.mxu0 0.0
    %1929 = vmatpush.msra.mxu0 0.0
    %1930 = vmatpush.msra.mxu0 0.0
    %1931 = vmatpush.msra.mxu0 0.0
    %1932 = vmatpush.msra.mxu0 0.0
    %1933 = vmatpush.msra.mxu0 0.0
    %1934 = vmatpush.msra.mxu0 %v440
    %1935 = vmatpush.msra.mxu0 %v439
    %1936 = vmatpush.msra.mxu0 %v438
    %1937 = vmatpush.msra.mxu0 %v437
    %1938 = vmatmul.f32.gmra.mxu0 %v1920
    %v1939 = vpop.f32.mrf.mxu0
    %v1940 = vadd.f32 0.0, %v1939
    %1941 = vdwg.mxu0
    %v1942 = vmul.f32 %v1916, %v1916
    %vm1943 = vcmask 257024
    %v1944 = vsel %vm1943, %v1942, 0.0
    %1945 = vadd.xlane.f32.xlu0 %v1944
    %v1946 = vpop.xlane.xlu0 %1945
    %v1947 = vrsqrt.pop %v1946
    %v1948 = vmul.f32 %v1947, %v1946
    %v1949 = vmul.f32 %v1948, %v1947
    %v1950 = vmul.f32 0.5, %v1949
    %v1951 = vsub.f32 1.5, %v1950
    %v1952 = vmul.f32 %v1947, %v1951
    %vm1953 = vweird.f32 %v1946
    %vm1954 = vweird.f32 %v1947
    %vm1955 = vmor %vm1953, %vm1954
    %v1956 = vsel %vm1955, %v1947, %v1952
    %v1957 = vmul.f32 %v1916, %v1956
    %v1958 = vmul.f32 %v1940, %v1940
    %v1959 = vsel %vm1943, %v1958, 0.0
    %1960 = vadd.xlane.f32.xlu0 %v1959
    %v1961 = vpop.xlane.xlu0 %1960
    %v1962 = vrsqrt.pop %v1961
    %v1963 = vmul.f32 %v1962, %v1961
    %v1964 = vmul.f32 %v1963, %v1962
    %v1965 = vmul.f32 0.5, %v1964
    %v1966 = vsub.f32 1.5, %v1965
    %v1967 = vmul.f32 %v1962, %v1966
    %vm1968 = vweird.f32 %v1961
    %vm1969 = vweird.f32 %v1962
    %vm1970 = vmor %vm1968, %vm1969
    %v1971 = vsel %vm1970, %v1962, %v1967
    %v1972 = vmul.f32 %v1940, %v1971
    %s1973 = sld [smem:[#allocation2]]
    %v1974 = vstv %s1973
    %v1975 = vmul.f32 %v1974, 1.442695
    %v1976 = vpow.pop %v1975
    %s1977 = vtos %v1976
    %v1979 = vsel %vm486, %v1957, 0
    %v1982 = vsel %vm486, %v1972, 0
    %1984 = vmatpush.xpose.msra.mxu0 0.0
    %1985 = vmatpush.xpose.msra.mxu0 0.0
    %1986 = vmatpush.xpose.msra.mxu0 0.0
    %1987 = vmatpush.xpose.msra.mxu0 0.0
    %1988 = vmatpush.xpose.msra.mxu0 0.0
    %1989 = vmatpush.xpose.msra.mxu0 0.0
    %1990 = vmatpush.xpose.msra.mxu0 0.0
    %1991 = vmatpush.xpose.msra.mxu0 0.0
    %1992 = vmatpush.xpose.msra.mxu0 0.0
    %1993 = vmatpush.xpose.msra.mxu0 0.0
    %1994 = vmatpush.xpose.msra.mxu0 0.0
    %1995 = vmatpush.xpose.msra.mxu0 0.0
    %1996 = vmatpush.xpose.msra.mxu0 0.0
    %1997 = vmatpush.xpose.msra.mxu0 0.0
    %1998 = vmatpush.xpose.msra.mxu0 0.0
    %1999 = vmatpush.xpose.msra.mxu0 %v1982
    %2000 = vmatmul.f32.gmra.mxu0 %v1979
    %v2001 = vpop.f32.mrf.mxu0
    %v2002 = vadd.f32 0.0, %v2001
    %2003 = vdwg.mxu0
    %v2004 = vstv %s1977
    %v2005 = vmul.f32 %v2004, %v2002
    %v2006 = vlaneseq
    %v2007 = vshrl.u32 %v2006, 7
    %v2008 = vlaneseq
    %v2009 = vand.u32 %v2008, 127
    %vm2010 = vcmp.eq.s32.totalorder %v2007, %v2009
    %v2011 = vsel %vm2010, %v2005, 0.0
    %vm2012 = vcmask 27648
    %v2013 = vsel %vm2012, %v2005, -inf
    %2014 = vmax.xlane.f32.xlu0 %v2013
    %v2015 = vpop.xlane.xlu0 %2014
    %v2016 = vsub.f32 %v2005, %v2015
    %v2017 = vmul.f32 %v2016, 1.442695
    %v2018 = vpow.pop %v2017
    %v2019 = vsel %vm2012, %v2018, 0.0
    %2020 = vadd.xlane.f32.xlu0 %v2019
    %v2021 = vpop.xlane.xlu0 %2020
    %v2022 = vlog2.pop %v2021
    %v2023 = vmul.f32 %v2022, 0.6931472
    %v2024 = vadd.f32 %v2023, %v2015
    %v2025 = vrot.slane %v2013, 4
    %v2026 = vmax.f32 %v2013, %v2025
    %v2027 = vrot.slane %v2026, 2
    %v2028 = vmax.f32 %v2026, %v2027
    %v2029 = vrot.slane %v2028, 1
    %v2030 = vmax.f32 %v2028, %v2029
    %v2031 = vsub.f32 %v2005, %v2030
    %v2032 = vmul.f32 %v2031, 1.442695
    %v2033 = vpow.pop %v2032
    %v2034 = vsel %vm2012, %v2033, 0.0
    %v2035 = vrot.slane %v2034, 4
    %v2036 = vadd.f32 %v2034, %v2035
    %v2037 = vrot.slane %v2036, 2
    %v2038 = vadd.f32 %v2036, %v2037
    %v2039 = vrot.slane %v2038, 1
    %v2040 = vadd.f32 %v2038, %v2039
    %v2041 = vlog2.pop %v2040
    %v2042 = vmul.f32 %v2041, 0.6931472
    %v2043 = vadd.f32 %v2042, %v2030
    %v2044 = vsel %vm2012, %v2011, 0.0
    %2045 = vadd.xlane.f32.xlu0 %v2044
    %v2046 = vpop.xlane.xlu0 %2045
    %v2047 = vsub.f32 %v2024, %v2046
    %vm2048 = vcmask 3072
    %v2049 = vsel %vm2048, %v2047, 0.0
    %2050 = vadd.xlane.f32.xlu0 %v2049
    %v2051 = vpop.xlane.xlu0 %2050
    %v2052 = vrot.slane %v2051, 4
    %v2053 = vadd.f32 %v2051, %v2052
    %v2054 = vrot.slane %v2053, 2
    %v2055 = vadd.f32 %v2053, %v2054
    %v2056 = vrot.slane %v2055, 1
    %v2057 = vadd.f32 %v2055, %v2056
    %s2058 = vtos %v2057
    %v2059 = vrcp.pop 4.0
    %v2060 = vmul.f32 4.0, %v2059
    %v2061 = vsub.f32 1.0, %v2060
    %v2062 = vmul.f32 %v2059, %v2061
    %v2063 = vadd.f32 %v2059, %v2062
    %vm2064 = vweird.f32 %v2059
    %v2065 = vsel %vm2064, %v2059, %v2063
    %s2066 = vtos %v2065
    %s2067 = smul.f32 %s2058, %s2066
    %v2068 = vrot.slane %v2044, 4
    %v2069 = vadd.f32 %v2044, %v2068
    %v2070 = vrot.slane %v2069, 2
    %v2071 = vadd.f32 %v2069, %v2070
    %v2072 = vrot.slane %v2071, 1
    %v2073 = vadd.f32 %v2071, %v2072
    %v2074 = vsub.f32 %v2043, %v2073
    %vm2075 = vcmask 24576
    %v2076 = vsel %vm2075, %v2074, 0.0
    %2077 = vadd.xlane.f32.xlu0 %v2076
    %v2078 = vpop.xlane.xlu0 %2077
    %v2079 = vrot.slane %v2078, 4
    %v2080 = vadd.f32 %v2078, %v2079
    %v2081 = vrot.slane %v2080, 2
    %v2082 = vadd.f32 %v2080, %v2081
    %v2083 = vrot.slane %v2082, 1
    %v2084 = vadd.f32 %v2082, %v2083
    %s2085 = vtos %v2084
    %v2086 = vrcp.pop 4.0
    %v2087 = vmul.f32 4.0, %v2086
    %v2088 = vsub.f32 1.0, %v2087
    %v2089 = vmul.f32 %v2086, %v2088
    %v2090 = vadd.f32 %v2086, %v2089
    %vm2091 = vweird.f32 %v2086
    %v2092 = vsel %vm2091, %v2086, %v2090
    %s2093 = vtos %v2092
    %s2094 = smul.f32 %s2085, %s2093
    %s2095 = sadd.f32 %s2067, %s2094
    %s2096 = smul.f32 %s2095, 0.5
    %s2097 = scalar_lea.smem [#allocation38], 0
    %2098 = sst [smem:[%s2097]] %s2096
    // Predicated region
    $region194: #{tpu_custom_call.1} parent=1 // pred_check
      _
    $region195: #{tpu_custom_call.1} parent=1 // pred_check_branch
      %2100 = sbr.rel (0) target = $region197
    $region196: #{tpu_custom_call.1} parent=1 // pred_region
      %2102 = vsyncadd [#allocation5], 0
      %s2104 = sshll.u32 %s26, 4
      %s2105 = int_to_ptr.hbm [resolvable:$true] %s2104
      %2107 = dma.smem_to_hbm [#allocation38], 16, %s2105, [#allocation5]
    $region197: #{tpu_custom_call.1} parent=1 // pred_fallthru
      _
    // Predicated region
    $region198: #{tpu_custom_call.1} parent=1 // pred_check
      _
    $region199: #{tpu_custom_call.1} parent=1 // pred_check_branch
      %2109 = sbr.rel (0) target = $region201
    $region200: #{tpu_custom_call.1} parent=1 // pred_region
      %2111 = dma.done [#allocation5], 16
    $region201: #{tpu_custom_call.1} parent=1 // pred_fallthru
      _
    %2112 = sfence
    %2113 = vsyncpa [#allocation4], 1
    %2114 = vsyncpa [#allocation7], 1
    %2115 = vsyncpa [#allocation10], 1
    %2116 = vsyncpa [#allocation13], 1
    %2117 = vsyncpa [#allocation16], 1
    %2118 = vsyncpa [#allocation19], 1
    %2119 = vsyncpa [#allocation22], 1
    %2120 = vsyncpa [#allocation25], 1
    %2121 = vsyncpa [#allocation28], 1
    %2122 = vsyncpa [#allocation31], 1
    %2123 = vsyncpa [#allocation34], 1
    %2124 = vsyncpa [#allocation37], 1
    %2125 = vsyncpa [#allocation5], 1

</llo_original>
